<compile_context>
chip_gen: v7x
topology: tpu7x:2x2x1
jax: 0.10.0
libtpu: 0.0.40
codegen_flags: <defaults>
</compile_context>

<pallas_src>
import jax
import jax.numpy as jnp
from jax.experimental import pallas as pl
from jax.experimental.pallas import tpu as pltpu


_MIN_TILE = 256            # MXU-M friendly and a multiple of 16 (bf16 sublanes)
_MAX_TILE = 2048           # double-buffered footprint still only a few MiB


def gen_kernel(alpha_ref, x_ref, z_ref, w1x_ref, w1z_ref, w2_ref, out_ref):
    """out = PReLU([x | z] @ W1^T) @ W2^T, with the concat split into two matmuls."""
    # f32 activations arrive straight from HBM; cast to bf16 on the VPU right
    # before the MXU (no separate wrapper-side cast pass).
    xb = x_ref[...].astype(w1x_ref.dtype)
    zb = z_ref[...].astype(w1z_ref.dtype)

    # First Linear, split over the concat boundary: h = x @ W1x + z @ W1z.
    h = jnp.dot(xb, w1x_ref[...], preferred_element_type=jnp.float32)
    h = h + jnp.dot(zb, w1z_ref[...], preferred_element_type=jnp.float32)

    # PReLU with a single learnable scalar (nn.PReLU default num_parameters=1),
    # kept in f32 (v5e has no bf16 VPU path).
    # TODO(synk): if the module were built with num_parameters=out_dim, alpha
    # would need to be a (1, out_dim) vector broadcast across sublanes instead.
    a = alpha_ref[0, 0]
    h = jnp.where(h >= 0, h, a * h)

    # Second Linear: bf16 operands on the MXU, f32 accumulation, store in out dtype.
    out_ref[...] = jnp.dot(h.astype(w2_ref.dtype), w2_ref[...],
                           preferred_element_type=jnp.float32).astype(out_ref.dtype)


def prepare_gen_params(w1_t, w2_t, alpha, compute_dtype=jnp.bfloat16):
    """One-time weight prep (hoisted out of the per-step forward).

    w1_t : (out_dim + z_dim, out_dim)  first Linear weight, transposed
    w2_t : (out_dim, contra_dim)       second Linear weight, transposed
    alpha: scalar PReLU weight
    """
    out_dim = w2_t.shape[0]
    w1x = jnp.asarray(w1_t[:out_dim, :], compute_dtype)   # (out_dim, out_dim)
    w1z = jnp.asarray(w1_t[out_dim:, :], compute_dtype)   # (z_dim,  out_dim)
    w2 = jnp.asarray(w2_t, compute_dtype)                 # (out_dim, contra_dim)
    alpha_arr = jnp.asarray(alpha, jnp.float32).reshape(1, 1)
    return w1x, w1z, w2, alpha_arr


def _num_tensorcores():
    """Best-effort detection of megacore chips (2 TensorCores per chip)."""
    try:
        kind = jax.devices()[0].device_kind.lower()
        if any(tag in kind for tag in ("v7", "v5p", "v4")):
            return 2
    except Exception:
        pass
    return 1


def _choose_tile_b(B, n_tc):
    if n_tc > 1 and B >= 2 * _MIN_TILE:
        # Megacore (v7x): keep >=2 (even) tiles so both TensorCores get work.
        tile = min(_MAX_TILE, B // n_tc)
    elif B <= _MAX_TILE:
        # Single TensorCore (v5e/v6e) and small B: one tile skips the pipeline
        # prologue/epilogue entirely (per-step overhead > data movement here).
        return B
    else:
        tile = _MAX_TILE
    tile = max(_MIN_TILE, (tile // _MIN_TILE) * _MIN_TILE)
    return min(tile, B)


def gen_forward(x, noise, params, *, tile_b=None, out_dtype=jnp.bfloat16):
    """GEN forward.

    x      : (B, out_dim)  float32
    noise  : (B, z_dim)    float32
    params : output of prepare_gen_params (bf16 W1x, W1z, W2 + (1,1) f32 alpha)
    """
    w1x, w1z, w2, alpha_arr = params
    B, out_dim = x.shape
    z_dim = noise.shape[1]
    contra_dim = w2.shape[1]

    if tile_b is None:
        tile_b = _choose_tile_b(B, _num_tensorcores())
    else:
        tile_b = max(8, min(int(tile_b), B))
        if tile_b != B:
            tile_b = (tile_b // 8) * 8
    nb = pl.cdiv(B, tile_b)

    # Single-buffer the grid-invariant weight blocks only once they are big
    # enough to matter for VMEM (e.g. large feature dims on v7x's 64 MiB VMEM);
    # at demo sizes leave default pipelining alone.
    w_elt = jnp.dtype(w2.dtype).itemsize
    weight_bytes = w_elt * (out_dim * out_dim + z_dim * out_dim + out_dim * contra_dim)
    wmode = pl.Buffered(1) if weight_bytes >= (8 << 20) else None
    w_bufs = 1 if wmode is not None else 2

    # Right-size the VMEM limit from the actual buffer footprint (+ headroom).
    out_elt = jnp.dtype(out_dtype).itemsize
    act_bytes = 2 * tile_b * (out_dim * 4 + z_dim * 4 + contra_dim * out_elt)
    footprint = act_bytes + w_bufs * weight_bytes
    vmem_limit = int(min(48 << 20, footprint + (8 << 20)))

    return pl.pallas_call(
        gen_kernel,
        out_shape=jax.ShapeDtypeStruct((B, contra_dim), out_dtype),
        grid_spec=pltpu.PrefetchScalarGridSpec(
            num_scalar_prefetch=0,
            grid=(nb,),
            in_specs=[
                # PReLU alpha: single 32-bit word in SMEM.
                pl.BlockSpec((1, 1), lambda i: (0, 0),
                             memory_space=pltpu.MemorySpace.SMEM),
                # Batch-tiled f32 activations (cast to bf16 inside the kernel).
                pl.BlockSpec((tile_b, out_dim), lambda i: (i, 0)),
                pl.BlockSpec((tile_b, z_dim), lambda i: (i, 0)),
                # Weights: constant index_map -> VMEM-resident across tiles.
                pl.BlockSpec((out_dim, out_dim), lambda i: (0, 0),
                             pipeline_mode=wmode),
                pl.BlockSpec((z_dim, out_dim), lambda i: (0, 0),
                             pipeline_mode=wmode),
                pl.BlockSpec((out_dim, contra_dim), lambda i: (0, 0),
                             pipeline_mode=wmode),
            ],
            out_specs=pl.BlockSpec((tile_b, contra_dim), lambda i: (i, 0)),
        ),
        compiler_params=pltpu.CompilerParams(
            # Batch tiles are independent -> shard across TCs on megacore chips.
            dimension_semantics=("parallel",),
            vmem_limit_bytes=vmem_limit,
        ),
    )(alpha_arr, x, noise, w1x, w1z, w2)


if __name__ == "__main__":
    # Small, lane-friendly shapes consistent with the module's (B, feat) inputs.
    batch, out_dim, z_dim, contra_dim = 512, 128, 64, 128

    key = jax.random.PRNGKey(0)
    kx, kn, kw1, kw2 = jax.random.split(key, 4)

    x = jax.random.normal(kx, (batch, out_dim), dtype=jnp.float32)
    noise = jax.random.normal(kn, (batch, z_dim), dtype=jnp.float32)

    # Deterministic parameter init (kaiming-uniform-like scale, no bias).
    in1 = out_dim + z_dim
    w1 = jax.random.uniform(kw1, (out_dim, in1), jnp.float32,
                            -1.0 / jnp.sqrt(in1), 1.0 / jnp.sqrt(in1))
    w2 = jax.random.uniform(kw2, (contra_dim, out_dim), jnp.float32,
                            -1.0 / jnp.sqrt(out_dim), 1.0 / jnp.sqrt(out_dim))
    alpha = 0.25  # nn.PReLU default init

    # One-time weight prep (transpose to (in, out), split across the concat
    # boundary, cast to bf16) -- hoisted out of the per-call forward.
    params = prepare_gen_params(w1.T, w2.T, alpha)

    out = gen_forward(x, noise, params)
    out = jax.block_until_ready(out)

    # Reference following the same bf16-operand / f32-accumulate / bf16-out path.
    xb = x.astype(jnp.bfloat16)
    zb = noise.astype(jnp.bfloat16)
    w1x_b, w1z_b, w2_b, _ = params
    h = (jnp.dot(xb, w1x_b, preferred_element_type=jnp.float32)
         + jnp.dot(zb, w1z_b, preferred_element_type=jnp.float32))
    h = jnp.where(h >= 0, h, alpha * h)
    ref = jnp.dot(h.astype(jnp.bfloat16), w2_b,
                  preferred_element_type=jnp.float32)

    out_f32 = out.astype(jnp.float32)
    assert out.shape == (batch, contra_dim)
    assert out.dtype == jnp.bfloat16
    assert jnp.allclose(out_f32, ref, atol=1e-2, rtol=1e-2), "mismatch vs reference"

    # Sanity check vs. the full-precision math of the original module.
    h32 = jnp.concatenate([x, noise], axis=-1) @ w1.T
    h32 = jnp.where(h32 >= 0, h32, alpha * h32)
    ref32 = h32 @ w2.T
    assert jnp.allclose(out_f32, ref32, atol=5e-2, rtol=5e-2), "bf16 path drifted"

    print("KERNEL_OK")
</pallas_src>

<mosaic_0001>
module attributes {stable_mosaic.version = 11 : i64} {
  func.func @gen_kernel(%arg0: i32, %arg1: memref<1x1xf32, #tpu.memory_space<smem>>, %arg2: memref<512x128xf32, #tpu.memory_space<vmem>>, %arg3: memref<512x64xf32, #tpu.memory_space<vmem>>, %arg4: memref<128x128xbf16, #tpu.memory_space<vmem>>, %arg5: memref<64x128xbf16, #tpu.memory_space<vmem>>, %arg6: memref<128x128xbf16, #tpu.memory_space<vmem>>, %arg7: memref<512x128xbf16, #tpu.memory_space<vmem>>) attributes {dimension_semantics = [#tpu.dimension_semantics<parallel>], iteration_bounds = array<i64: 1>, scalar_prefetch = 0 : i64, scratch_operands = 0 : i64, tpu.core_type = #tpu.core_type<tc>, window_params = [{transform_indices = @transform_0, window_bounds = array<i64: 1, 1>}, {transform_indices = @transform_1, window_bounds = array<i64: 512, 128>}, {transform_indices = @transform_2, window_bounds = array<i64: 512, 64>}, {pipeline_mode = #tpu.pipeline_mode<synchronous>, transform_indices = @transform_3, window_bounds = array<i64: 128, 128>}, {pipeline_mode = #tpu.pipeline_mode<synchronous>, transform_indices = @transform_4, window_bounds = array<i64: 64, 128>}, {pipeline_mode = #tpu.pipeline_mode<synchronous>, transform_indices = @transform_5, window_bounds = array<i64: 128, 128>}, {transform_indices = @transform_6, window_bounds = array<i64: 512, 128>}]} {
    %c0 = arith.constant 0 : index
    %c0_0 = arith.constant 0 : index
    %0 = vector.load %arg2[%c0, %c0_0] : memref<512x128xf32, #tpu.memory_space<vmem>>, vector<512x128xf32>
    %1 = arith.truncf %0 : vector<512x128xf32> to vector<512x128xbf16>
    %c0_1 = arith.constant 0 : index
    %c0_2 = arith.constant 0 : index
    %2 = vector.load %arg3[%c0_1, %c0_2] : memref<512x64xf32, #tpu.memory_space<vmem>>, vector<512x64xf32>
    %3 = arith.truncf %2 : vector<512x64xf32> to vector<512x64xbf16>
    %c0_3 = arith.constant 0 : index
    %c0_4 = arith.constant 0 : index
    %4 = vector.load %arg4[%c0_3, %c0_4] : memref<128x128xbf16, #tpu.memory_space<vmem>>, vector<128x128xbf16>
    %cst = arith.constant dense<0.000000e+00> : vector<512x128xf32>
    %5 = tpu.matmul %1, %4, %cst {dimension_numbers = #tpu.dot_dimension_numbers<[1], [0], [0], [1], [0, 0, 1, 1], [], []>} : vector<512x128xbf16>, vector<128x128xbf16>, vector<512x128xf32> -> vector<512x128xf32>
    %c0_5 = arith.constant 0 : index
    %c0_6 = arith.constant 0 : index
    %6 = vector.load %arg5[%c0_5, %c0_6] : memref<64x128xbf16, #tpu.memory_space<vmem>>, vector<64x128xbf16>
    %cst_7 = arith.constant dense<0.000000e+00> : vector<512x128xf32>
    %7 = tpu.matmul %3, %6, %cst_7 {dimension_numbers = #tpu.dot_dimension_numbers<[1], [0], [0], [1], [0, 0, 1, 1], [], []>} : vector<512x64xbf16>, vector<64x128xbf16>, vector<512x128xf32> -> vector<512x128xf32>
    %8 = arith.addf %5, %7 : vector<512x128xf32>
    %c0_8 = arith.constant 0 : index
    %c0_9 = arith.constant 0 : index
    %9 = memref.load %arg1[%c0_8, %c0_9] : memref<1x1xf32, #tpu.memory_space<smem>>
    %cst_10 = arith.constant 0.000000e+00 : f32
    %10 = vector.broadcast %cst_10 : f32 to vector<512x128xf32>
    %11 = arith.cmpf oge, %8, %10 : vector<512x128xf32>
    %12 = vector.broadcast %9 : f32 to vector<512x128xf32>
    %13 = arith.mulf %12, %8 : vector<512x128xf32>
    %14 = arith.select %11, %8, %13 : vector<512x128xi1>, vector<512x128xf32>
    %15 = arith.truncf %14 : vector<512x128xf32> to vector<512x128xbf16>
    %c0_11 = arith.constant 0 : index
    %c0_12 = arith.constant 0 : index
    %16 = vector.load %arg6[%c0_11, %c0_12] : memref<128x128xbf16, #tpu.memory_space<vmem>>, vector<128x128xbf16>
    %cst_13 = arith.constant dense<0.000000e+00> : vector<512x128xf32>
    %17 = tpu.matmul %15, %16, %cst_13 {dimension_numbers = #tpu.dot_dimension_numbers<[1], [0], [0], [1], [0, 0, 1, 1], [], []>} : vector<512x128xbf16>, vector<128x128xbf16>, vector<512x128xf32> -> vector<512x128xf32>
    %18 = arith.truncf %17 : vector<512x128xf32> to vector<512x128xbf16>
    %c0_14 = arith.constant 0 : index
    %c0_15 = arith.constant 0 : index
    %19 = vector.load %arg7[%c0_14, %c0_15] : memref<512x128xbf16, #tpu.memory_space<vmem>>, vector<512x128xbf16>
    tpu.vector_store %arg7[%c0_14, %c0_15], %18 {strides = array<i32>} : memref<512x128xbf16, #tpu.memory_space<vmem>>, vector<512x128xbf16>,
    return
  }
  func.func @transform_0(%arg0: i32) -> (i32, i32) {
    %c0_i32 = arith.constant 0 : i32
    %c0_i32_0 = arith.constant 0 : i32
    %c0_i32_1 = arith.constant 0 : i32
    return %c0_i32, %c0_i32_0 : i32, i32
  }
  func.func @transform_1(%arg0: i32) -> (i32, i32) {
    %c0_i32 = arith.constant 0 : i32
    %c0_i32_0 = arith.constant 0 : i32
    return %arg0, %c0_i32 : i32, i32
  }
  func.func @transform_2(%arg0: i32) -> (i32, i32) {
    %c0_i32 = arith.constant 0 : i32
    %c0_i32_0 = arith.constant 0 : i32
    return %arg0, %c0_i32 : i32, i32
  }
  func.func @transform_3(%arg0: i32) -> (i32, i32) {
    %c0_i32 = arith.constant 0 : i32
    %c0_i32_0 = arith.constant 0 : i32
    %c0_i32_1 = arith.constant 0 : i32
    return %c0_i32, %c0_i32_0 : i32, i32
  }
  func.func @transform_4(%arg0: i32) -> (i32, i32) {
    %c0_i32 = arith.constant 0 : i32
    %c0_i32_0 = arith.constant 0 : i32
    %c0_i32_1 = arith.constant 0 : i32
    return %c0_i32, %c0_i32_0 : i32, i32
  }
  func.func @transform_5(%arg0: i32) -> (i32, i32) {
    %c0_i32 = arith.constant 0 : i32
    %c0_i32_0 = arith.constant 0 : i32
    %c0_i32_1 = arith.constant 0 : i32
    return %c0_i32, %c0_i32_0 : i32, i32
  }
  func.func @transform_6(%arg0: i32) -> (i32, i32) {
    %c0_i32 = arith.constant 0 : i32
    %c0_i32_0 = arith.constant 0 : i32
    return %arg0, %c0_i32 : i32, i32
  }
}

</mosaic_0001>

<llo_original>
// kernel: tpu_custom_call.1
$region0: #{tpu_custom_call.1}
  #allocation0 [shape = 'u32[]', space=smem, size = 0x4, offset = 0x4, fixed_abs, tag = 'smem constant byte address 0x4 - core index']
  #allocation1 [shape = 'u32[144,128]{1,0:T(1,128)}', space=vmem, size = 0x12000, scoped, tag = 'internal scratch']
  #allocation2 [shape = 'f32[1,1]{1,0:T(1,128)S(6)}', space=smem, size = 0x200, scoped, tag = 'scoped memory for tpu_custom_call.1']
  %s0 = inlined_call_operand.<no memory space> [shape: f32[1,1], index: 0, kind: input, shape index: {}]
  %s1 = inlined_call_operand.vmem [shape: f32[512,128], index: 1, kind: input, shape index: {}]
  %s2 = inlined_call_operand.vmem [shape: f32[512,64], index: 2, kind: input, shape index: {}]
  %s3 = inlined_call_operand.vmem [shape: bf16[128,128], index: 3, kind: input, shape index: {}]
  %s4 = inlined_call_operand.vmem [shape: bf16[64,128], index: 4, kind: input, shape index: {}]
  %s5 = inlined_call_operand.vmem [shape: bf16[128,128], index: 5, kind: input, shape index: {}]
  %s6 = inlined_call_operand.hbm [shape: bf16[512,128], index: 6, kind: output, shape index: {}]
  %s7 = sld [smem:[#allocation0]]
  $region34: #{tpu_custom_call.1} parent=0
    _
  %s9 = ssub.s32 1, %s7
  %s10 = scalar_select 0, %s9, %s7
  %11 = sst [smem:[#allocation2]] %s0
  $region1: #{tpu_custom_call.1} parent=0
    #allocation3 [shape = 'u8[131072]{0}', space=vmem, size = 0x20000, scoped, tag = 'output window, operand 0, single buffered']
    #allocation4 [shape = 's32[1]{0}', space=sflag, size = 0x4, scoped, tag = 'scoped memory for tpu_custom_call.1']
    %12 = vsyncpa [#allocation4], 0
    // Predicated region
    $region2: #{tpu_custom_call.1} parent=1 // pred_check
      _
    $region3: #{tpu_custom_call.1} parent=1 // pred_check_branch
      %14 = sbr.rel (0) target = $region5
    $region4: #{tpu_custom_call.1} parent=1 // pred_region
      _
    $region5: #{tpu_custom_call.1} parent=1 // pred_fallthru
      _
    // Predicated region
    $region6: #{tpu_custom_call.1} parent=1 // pred_check
      _
    $region7: #{tpu_custom_call.1} parent=1 // pred_check_branch
      %16 = sbr.rel (0) target = $region9
    $region8: #{tpu_custom_call.1} parent=1 // pred_region
      _
    $region9: #{tpu_custom_call.1} parent=1 // pred_fallthru
      _
    // Predicated region
    $region10: #{tpu_custom_call.1} parent=1 // pred_check
      _
    $region11: #{tpu_custom_call.1} parent=1 // pred_check_branch
      %18 = sbr.rel (0) target = $region13
    $region12: #{tpu_custom_call.1} parent=1 // pred_region
      _
    $region13: #{tpu_custom_call.1} parent=1 // pred_fallthru
      _
    // Predicated region
    $region14: #{tpu_custom_call.1} parent=1 // pred_check
      _
    $region15: #{tpu_custom_call.1} parent=1 // pred_check_branch
      %20 = sbr.rel (0) target = $region17
    $region16: #{tpu_custom_call.1} parent=1 // pred_region
      _
    $region17: #{tpu_custom_call.1} parent=1 // pred_fallthru
      _
    // Predicated region
    $region18: #{tpu_custom_call.1} parent=1 // pred_check
      _
    $region19: #{tpu_custom_call.1} parent=1 // pred_check_branch
      %22 = sbr.rel (0) target = $region21
    $region20: #{tpu_custom_call.1} parent=1 // pred_region
      _
    $region21: #{tpu_custom_call.1} parent=1 // pred_fallthru
      _
    // Predicated region
    $region22: #{tpu_custom_call.1} parent=1 // pred_check
      _
    $region23: #{tpu_custom_call.1} parent=1 // pred_check_branch
      %24 = sbr.rel (0) target = $region25
    $region24: #{tpu_custom_call.1} parent=1 // pred_region
      _
    $region25: #{tpu_custom_call.1} parent=1 // pred_fallthru
      _
    %v26 = vld [vmem:[%s1] sm:$0xff]
    %v27 = vld [vmem:[%s1 + $0x8] sm:$0xff]
    %v28 = vld [vmem:[%s1 + $0x10] sm:$0xff]
    %v29 = vld [vmem:[%s1 + $0x18] sm:$0xff]
    %v30 = vld [vmem:[%s1 + $0x20] sm:$0xff]
    %v31 = vld [vmem:[%s1 + $0x28] sm:$0xff]
    %v32 = vld [vmem:[%s1 + $0x30] sm:$0xff]
    %v33 = vld [vmem:[%s1 + $0x38] sm:$0xff]
    %v34 = vld [vmem:[%s1 + $0x40] sm:$0xff]
    %v35 = vld [vmem:[%s1 + $0x48] sm:$0xff]
    %v36 = vld [vmem:[%s1 + $0x50] sm:$0xff]
    %v37 = vld [vmem:[%s1 + $0x58] sm:$0xff]
    %v38 = vld [vmem:[%s1 + $0x60] sm:$0xff]
    %v39 = vld [vmem:[%s1 + $0x68] sm:$0xff]
    %v40 = vld [vmem:[%s1 + $0x70] sm:$0xff]
    %v41 = vld [vmem:[%s1 + $0x78] sm:$0xff]
    %v42 = vld [vmem:[%s1 + $0x80] sm:$0xff]
    %v43 = vld [vmem:[%s1 + $0x88] sm:$0xff]
    %v44 = vld [vmem:[%s1 + $0x90] sm:$0xff]
    %v45 = vld [vmem:[%s1 + $0x98] sm:$0xff]
    %v46 = vld [vmem:[%s1 + $0xa0] sm:$0xff]
    %v47 = vld [vmem:[%s1 + $0xa8] sm:$0xff]
    %v48 = vld [vmem:[%s1 + $0xb0] sm:$0xff]
    %v49 = vld [vmem:[%s1 + $0xb8] sm:$0xff]
    %v50 = vld [vmem:[%s1 + $0xc0] sm:$0xff]
    %v51 = vld [vmem:[%s1 + $0xc8] sm:$0xff]
    %v52 = vld [vmem:[%s1 + $0xd0] sm:$0xff]
    %v53 = vld [vmem:[%s1 + $0xd8] sm:$0xff]
    %v54 = vld [vmem:[%s1 + $0xe0] sm:$0xff]
    %v55 = vld [vmem:[%s1 + $0xe8] sm:$0xff]
    %v56 = vld [vmem:[%s1 + $0xf0] sm:$0xff]
    %v57 = vld [vmem:[%s1 + $0xf8] sm:$0xff]
    %v58 = vld [vmem:[%s1 + $0x100] sm:$0xff]
    %v59 = vld [vmem:[%s1 + $0x108] sm:$0xff]
    %v60 = vld [vmem:[%s1 + $0x110] sm:$0xff]
    %v61 = vld [vmem:[%s1 + $0x118] sm:$0xff]
    %v62 = vld [vmem:[%s1 + $0x120] sm:$0xff]
    %v63 = vld [vmem:[%s1 + $0x128] sm:$0xff]
    %v64 = vld [vmem:[%s1 + $0x130] sm:$0xff]
    %v65 = vld [vmem:[%s1 + $0x138] sm:$0xff]
    %v66 = vld [vmem:[%s1 + $0x140] sm:$0xff]
    %v67 = vld [vmem:[%s1 + $0x148] sm:$0xff]
    %v68 = vld [vmem:[%s1 + $0x150] sm:$0xff]
    %v69 = vld [vmem:[%s1 + $0x158] sm:$0xff]
    %v70 = vld [vmem:[%s1 + $0x160] sm:$0xff]
    %v71 = vld [vmem:[%s1 + $0x168] sm:$0xff]
    %v72 = vld [vmem:[%s1 + $0x170] sm:$0xff]
    %v73 = vld [vmem:[%s1 + $0x178] sm:$0xff]
    %v74 = vld [vmem:[%s1 + $0x180] sm:$0xff]
    %v75 = vld [vmem:[%s1 + $0x188] sm:$0xff]
    %v76 = vld [vmem:[%s1 + $0x190] sm:$0xff]
    %v77 = vld [vmem:[%s1 + $0x198] sm:$0xff]
    %v78 = vld [vmem:[%s1 + $0x1a0] sm:$0xff]
    %v79 = vld [vmem:[%s1 + $0x1a8] sm:$0xff]
    %v80 = vld [vmem:[%s1 + $0x1b0] sm:$0xff]
    %v81 = vld [vmem:[%s1 + $0x1b8] sm:$0xff]
    %v82 = vld [vmem:[%s1 + $0x1c0] sm:$0xff]
    %v83 = vld [vmem:[%s1 + $0x1c8] sm:$0xff]
    %v84 = vld [vmem:[%s1 + $0x1d0] sm:$0xff]
    %v85 = vld [vmem:[%s1 + $0x1d8] sm:$0xff]
    %v86 = vld [vmem:[%s1 + $0x1e0] sm:$0xff]
    %v87 = vld [vmem:[%s1 + $0x1e8] sm:$0xff]
    %v88 = vld [vmem:[%s1 + $0x1f0] sm:$0xff]
    %v89 = vld [vmem:[%s1 + $0x1f8] sm:$0xff]
    %v90 = vpack.c.bf16 %v27, %v26
    %v91 = vpack.c.bf16 %v29, %v28
    %v92 = vpack.c.bf16 %v31, %v30
    %v93 = vpack.c.bf16 %v33, %v32
    %v94 = vpack.c.bf16 %v35, %v34
    %v95 = vpack.c.bf16 %v37, %v36
    %v96 = vpack.c.bf16 %v39, %v38
    %v97 = vpack.c.bf16 %v41, %v40
    %v98 = vpack.c.bf16 %v43, %v42
    %v99 = vpack.c.bf16 %v45, %v44
    %v100 = vpack.c.bf16 %v47, %v46
    %v101 = vpack.c.bf16 %v49, %v48
    %v102 = vpack.c.bf16 %v51, %v50
    %v103 = vpack.c.bf16 %v53, %v52
    %v104 = vpack.c.bf16 %v55, %v54
    %v105 = vpack.c.bf16 %v57, %v56
    %v106 = vpack.c.bf16 %v59, %v58
    %v107 = vpack.c.bf16 %v61, %v60
    %v108 = vpack.c.bf16 %v63, %v62
    %v109 = vpack.c.bf16 %v65, %v64
    %v110 = vpack.c.bf16 %v67, %v66
    %v111 = vpack.c.bf16 %v69, %v68
    %v112 = vpack.c.bf16 %v71, %v70
    %v113 = vpack.c.bf16 %v73, %v72
    %v114 = vpack.c.bf16 %v75, %v74
    %v115 = vpack.c.bf16 %v77, %v76
    %v116 = vpack.c.bf16 %v79, %v78
    %v117 = vpack.c.bf16 %v81, %v80
    %v118 = vpack.c.bf16 %v83, %v82
    %v119 = vpack.c.bf16 %v85, %v84
    %v120 = vpack.c.bf16 %v87, %v86
    %v121 = vpack.c.bf16 %v89, %v88
    %v122 = vld [vmem:[%s2] sm:$0xff]
    %v123 = vld [vmem:[%s2 + $0x8] sm:$0xff]
    %v124 = vld [vmem:[%s2 + $0x10] sm:$0xff]
    %v125 = vld [vmem:[%s2 + $0x18] sm:$0xff]
    %v126 = vld [vmem:[%s2 + $0x20] sm:$0xff]
    %v127 = vld [vmem:[%s2 + $0x28] sm:$0xff]
    %v128 = vld [vmem:[%s2 + $0x30] sm:$0xff]
    %v129 = vld [vmem:[%s2 + $0x38] sm:$0xff]
    %v130 = vld [vmem:[%s2 + $0x40] sm:$0xff]
    %v131 = vld [vmem:[%s2 + $0x48] sm:$0xff]
    %v132 = vld [vmem:[%s2 + $0x50] sm:$0xff]
    %v133 = vld [vmem:[%s2 + $0x58] sm:$0xff]
    %v134 = vld [vmem:[%s2 + $0x60] sm:$0xff]
    %v135 = vld [vmem:[%s2 + $0x68] sm:$0xff]
    %v136 = vld [vmem:[%s2 + $0x70] sm:$0xff]
    %v137 = vld [vmem:[%s2 + $0x78] sm:$0xff]
    %v138 = vld [vmem:[%s2 + $0x80] sm:$0xff]
    %v139 = vld [vmem:[%s2 + $0x88] sm:$0xff]
    %v140 = vld [vmem:[%s2 + $0x90] sm:$0xff]
    %v141 = vld [vmem:[%s2 + $0x98] sm:$0xff]
    %v142 = vld [vmem:[%s2 + $0xa0] sm:$0xff]
    %v143 = vld [vmem:[%s2 + $0xa8] sm:$0xff]
    %v144 = vld [vmem:[%s2 + $0xb0] sm:$0xff]
    %v145 = vld [vmem:[%s2 + $0xb8] sm:$0xff]
    %v146 = vld [vmem:[%s2 + $0xc0] sm:$0xff]
    %v147 = vld [vmem:[%s2 + $0xc8] sm:$0xff]
    %v148 = vld [vmem:[%s2 + $0xd0] sm:$0xff]
    %v149 = vld [vmem:[%s2 + $0xd8] sm:$0xff]
    %v150 = vld [vmem:[%s2 + $0xe0] sm:$0xff]
    %v151 = vld [vmem:[%s2 + $0xe8] sm:$0xff]
    %v152 = vld [vmem:[%s2 + $0xf0] sm:$0xff]
    %v153 = vld [vmem:[%s2 + $0xf8] sm:$0xff]
    %v154 = vld [vmem:[%s2 + $0x100] sm:$0xff]
    %v155 = vld [vmem:[%s2 + $0x108] sm:$0xff]
    %v156 = vld [vmem:[%s2 + $0x110] sm:$0xff]
    %v157 = vld [vmem:[%s2 + $0x118] sm:$0xff]
    %v158 = vld [vmem:[%s2 + $0x120] sm:$0xff]
    %v159 = vld [vmem:[%s2 + $0x128] sm:$0xff]
    %v160 = vld [vmem:[%s2 + $0x130] sm:$0xff]
    %v161 = vld [vmem:[%s2 + $0x138] sm:$0xff]
    %v162 = vld [vmem:[%s2 + $0x140] sm:$0xff]
    %v163 = vld [vmem:[%s2 + $0x148] sm:$0xff]
    %v164 = vld [vmem:[%s2 + $0x150] sm:$0xff]
    %v165 = vld [vmem:[%s2 + $0x158] sm:$0xff]
    %v166 = vld [vmem:[%s2 + $0x160] sm:$0xff]
    %v167 = vld [vmem:[%s2 + $0x168] sm:$0xff]
    %v168 = vld [vmem:[%s2 + $0x170] sm:$0xff]
    %v169 = vld [vmem:[%s2 + $0x178] sm:$0xff]
    %v170 = vld [vmem:[%s2 + $0x180] sm:$0xff]
    %v171 = vld [vmem:[%s2 + $0x188] sm:$0xff]
    %v172 = vld [vmem:[%s2 + $0x190] sm:$0xff]
    %v173 = vld [vmem:[%s2 + $0x198] sm:$0xff]
    %v174 = vld [vmem:[%s2 + $0x1a0] sm:$0xff]
    %v175 = vld [vmem:[%s2 + $0x1a8] sm:$0xff]
    %v176 = vld [vmem:[%s2 + $0x1b0] sm:$0xff]
    %v177 = vld [vmem:[%s2 + $0x1b8] sm:$0xff]
    %v178 = vld [vmem:[%s2 + $0x1c0] sm:$0xff]
    %v179 = vld [vmem:[%s2 + $0x1c8] sm:$0xff]
    %v180 = vld [vmem:[%s2 + $0x1d0] sm:$0xff]
    %v181 = vld [vmem:[%s2 + $0x1d8] sm:$0xff]
    %v182 = vld [vmem:[%s2 + $0x1e0] sm:$0xff]
    %v183 = vld [vmem:[%s2 + $0x1e8] sm:$0xff]
    %v184 = vld [vmem:[%s2 + $0x1f0] sm:$0xff]
    %v185 = vld [vmem:[%s2 + $0x1f8] sm:$0xff]
    %v186 = vpack.c.bf16 %v123, %v122
    %v187 = vpack.c.bf16 %v125, %v124
    %v188 = vpack.c.bf16 %v127, %v126
    %v189 = vpack.c.bf16 %v129, %v128
    %v190 = vpack.c.bf16 %v131, %v130
    %v191 = vpack.c.bf16 %v133, %v132
    %v192 = vpack.c.bf16 %v135, %v134
    %v193 = vpack.c.bf16 %v137, %v136
    %v194 = vpack.c.bf16 %v139, %v138
    %v195 = vpack.c.bf16 %v141, %v140
    %v196 = vpack.c.bf16 %v143, %v142
    %v197 = vpack.c.bf16 %v145, %v144
    %v198 = vpack.c.bf16 %v147, %v146
    %v199 = vpack.c.bf16 %v149, %v148
    %v200 = vpack.c.bf16 %v151, %v150
    %v201 = vpack.c.bf16 %v153, %v152
    %v202 = vpack.c.bf16 %v155, %v154
    %v203 = vpack.c.bf16 %v157, %v156
    %v204 = vpack.c.bf16 %v159, %v158
    %v205 = vpack.c.bf16 %v161, %v160
    %v206 = vpack.c.bf16 %v163, %v162
    %v207 = vpack.c.bf16 %v165, %v164
    %v208 = vpack.c.bf16 %v167, %v166
    %v209 = vpack.c.bf16 %v169, %v168
    %v210 = vpack.c.bf16 %v171, %v170
    %v211 = vpack.c.bf16 %v173, %v172
    %v212 = vpack.c.bf16 %v175, %v174
    %v213 = vpack.c.bf16 %v177, %v176
    %v214 = vpack.c.bf16 %v179, %v178
    %v215 = vpack.c.bf16 %v181, %v180
    %v216 = vpack.c.bf16 %v183, %v182
    %v217 = vpack.c.bf16 %v185, %v184
    %v218 = vld [vmem:[%s3] sm:$0xf]
    %v219 = vld [vmem:[%s3 + $0x4] sm:$0xf]
    %v220 = vld [vmem:[%s3 + $0x8] sm:$0xf]
    %v221 = vld [vmem:[%s3 + $0xc] sm:$0xf]
    %v222 = vld [vmem:[%s3 + $0x10] sm:$0xf]
    %v223 = vld [vmem:[%s3 + $0x14] sm:$0xf]
    %v224 = vld [vmem:[%s3 + $0x18] sm:$0xf]
    %v225 = vld [vmem:[%s3 + $0x1c] sm:$0xf]
    %v226 = vld [vmem:[%s3 + $0x20] sm:$0xf]
    %v227 = vld [vmem:[%s3 + $0x24] sm:$0xf]
    %v228 = vld [vmem:[%s3 + $0x28] sm:$0xf]
    %v229 = vld [vmem:[%s3 + $0x2c] sm:$0xf]
    %v230 = vld [vmem:[%s3 + $0x30] sm:$0xf]
    %v231 = vld [vmem:[%s3 + $0x34] sm:$0xf]
    %v232 = vld [vmem:[%s3 + $0x38] sm:$0xf]
    %v233 = vld [vmem:[%s3 + $0x3c] sm:$0xf]
    %v234 = vld [vmem:[%s4] sm:$0xf]
    %v235 = vld [vmem:[%s4 + $0x4] sm:$0xf]
    %v236 = vld [vmem:[%s4 + $0x8] sm:$0xf]
    %v237 = vld [vmem:[%s4 + $0xc] sm:$0xf]
    %v238 = vld [vmem:[%s4 + $0x10] sm:$0xf]
    %v239 = vld [vmem:[%s4 + $0x14] sm:$0xf]
    %v240 = vld [vmem:[%s4 + $0x18] sm:$0xf]
    %v241 = vld [vmem:[%s4 + $0x1c] sm:$0xf]
    %v250 = vunpack.c.l.b16 %v234
    %v251 = vunpack.c.l.b16 %v235
    %v252 = vunpack.c.l.b16 %v236
    %v253 = vunpack.c.l.b16 %v237
    %v254 = vunpack.c.l.b16 %v238
    %v255 = vunpack.c.l.b16 %v239
    %v256 = vunpack.c.l.b16 %v240
    %v257 = vunpack.c.l.b16 %v241
    %v258 = vpack.c.b16 %v251, %v250
    %v259 = vpack.c.b16 %v253, %v252
    %v260 = vpack.c.b16 %v255, %v254
    %v261 = vpack.c.b16 %v257, %v256
    %vm266 = vcmask 523264
    %v268 = vsel %vm266, %v186, 0
    %v271 = vsel %vm266, %v187, 0
    %v274 = vsel %vm266, %v188, 0
    %v277 = vsel %vm266, %v189, 0
    %v280 = vsel %vm266, %v190, 0
    %v283 = vsel %vm266, %v191, 0
    %v286 = vsel %vm266, %v192, 0
    %v289 = vsel %vm266, %v193, 0
    %v292 = vsel %vm266, %v194, 0
    %v295 = vsel %vm266, %v195, 0
    %v298 = vsel %vm266, %v196, 0
    %v301 = vsel %vm266, %v197, 0
    %v304 = vsel %vm266, %v198, 0
    %v307 = vsel %vm266, %v199, 0
    %v310 = vsel %vm266, %v200, 0
    %v313 = vsel %vm266, %v201, 0
    %v316 = vsel %vm266, %v202, 0
    %v319 = vsel %vm266, %v203, 0
    %v322 = vsel %vm266, %v204, 0
    %v325 = vsel %vm266, %v205, 0
    %v328 = vsel %vm266, %v206, 0
    %v331 = vsel %vm266, %v207, 0
    %v334 = vsel %vm266, %v208, 0
    %v337 = vsel %vm266, %v209, 0
    %v340 = vsel %vm266, %v210, 0
    %v343 = vsel %vm266, %v211, 0
    %v346 = vsel %vm266, %v212, 0
    %v349 = vsel %vm266, %v213, 0
    %v352 = vsel %vm266, %v214, 0
    %v355 = vsel %vm266, %v215, 0
    %v358 = vsel %vm266, %v216, 0
    %v361 = vsel %vm266, %v217, 0
    %363 = vmatprep.subr.bf16.mxu0 0
    %364 = vmatpush1.bf16.msra.mxu0 %v258
    %365 = vmatprep.subr.bf16.mxu0 0
    %366 = vmatpush1.bf16.msra.mxu0 %v259
    %367 = vmatprep.subr.bf16.mxu0 0
    %368 = vmatpush1.bf16.msra.mxu0 %v260
    %369 = vmatprep.subr.bf16.mxu0 0
    %370 = vmatpush1.bf16.msra.mxu0 %v261
    %371 = vmatprep.subr.bf16.mxu0 0
    %372 = vmatpush1.bf16.msra.mxu0 0
    %373 = vmatprep.subr.bf16.mxu0 0
    %374 = vmatpush1.bf16.msra.mxu0 0
    %375 = vmatprep.subr.bf16.mxu0 0
    %376 = vmatpush1.bf16.msra.mxu0 0
    %377 = vmatprep.subr.bf16.mxu0 0
    %378 = vmatpush1.bf16.msra.mxu0 0
    %379 = vmatprep.subr.bf16.mxu0 0
    %380 = vmatpush1.bf16.msra.mxu0 0
    %381 = vmatprep.subr.bf16.mxu0 0
    %382 = vmatpush1.bf16.msra.mxu0 0
    %383 = vmatprep.subr.bf16.mxu0 0
    %384 = vmatpush1.bf16.msra.mxu0 0
    %385 = vmatprep.subr.bf16.mxu0 0
    %386 = vmatpush1.bf16.msra.mxu0 0
    %387 = vmatprep.subr.bf16.mxu0 0
    %388 = vmatpush1.bf16.msra.mxu0 0
    %389 = vmatprep.subr.bf16.mxu0 0
    %390 = vmatpush1.bf16.msra.mxu0 0
    %391 = vmatprep.subr.bf16.mxu0 0
    %392 = vmatpush1.bf16.msra.mxu0 0
    %393 = vmatprep.subr.bf16.mxu0 0
    %394 = vmatpush1.bf16.msra.mxu0 0
    %395 = vmatprep.mubr.bf16.mxu0 0
    %396 = vmatmul.mubr.bf16.gmra.mrb[0].mxu0 %v268
    %v397 = vpop.f32.mrb[0].mxu0
    %v398 = vadd.f32 0.0, %v397
    %v399 = vpop.f32.mrb[0].mxu0
    %v400 = vpop.f32.mrb[0].mxu0
    %v401 = vadd.f32 0.0, %v400
    %v402 = vpop.f32.mrb[0].mxu0
    %403 = vmatprep.mubr.bf16.mxu0 0
    %404 = vmatmul.mubr.bf16.gmra.mrb[0].mxu0 %v271
    %v405 = vpop.f32.mrb[0].mxu0
    %v406 = vadd.f32 0.0, %v405
    %v407 = vpop.f32.mrb[0].mxu0
    %v408 = vpop.f32.mrb[0].mxu0
    %v409 = vadd.f32 0.0, %v408
    %v410 = vpop.f32.mrb[0].mxu0
    %411 = vmatprep.mubr.bf16.mxu0 0
    %412 = vmatmul.mubr.bf16.gmra.mrb[0].mxu0 %v274
    %v413 = vpop.f32.mrb[0].mxu0
    %v414 = vadd.f32 0.0, %v413
    %v415 = vpop.f32.mrb[0].mxu0
    %v416 = vpop.f32.mrb[0].mxu0
    %v417 = vadd.f32 0.0, %v416
    %v418 = vpop.f32.mrb[0].mxu0
    %419 = vmatprep.mubr.bf16.mxu0 0
    %420 = vmatmul.mubr.bf16.gmra.mrb[0].mxu0 %v277
    %v421 = vpop.f32.mrb[0].mxu0
    %v422 = vadd.f32 0.0, %v421
    %v423 = vpop.f32.mrb[0].mxu0
    %v424 = vpop.f32.mrb[0].mxu0
    %v425 = vadd.f32 0.0, %v424
    %v426 = vpop.f32.mrb[0].mxu0
    %427 = vmatprep.mubr.bf16.mxu0 0
    %428 = vmatmul.mubr.bf16.gmra.mrb[0].mxu0 %v280
    %v429 = vpop.f32.mrb[0].mxu0
    %v430 = vadd.f32 0.0, %v429
    %v431 = vpop.f32.mrb[0].mxu0
    %v432 = vpop.f32.mrb[0].mxu0
    %v433 = vadd.f32 0.0, %v432
    %v434 = vpop.f32.mrb[0].mxu0
    %435 = vmatprep.mubr.bf16.mxu0 0
    %436 = vmatmul.mubr.bf16.gmra.mrb[0].mxu0 %v283
    %v437 = vpop.f32.mrb[0].mxu0
    %v438 = vadd.f32 0.0, %v437
    %v439 = vpop.f32.mrb[0].mxu0
    %v440 = vpop.f32.mrb[0].mxu0
    %v441 = vadd.f32 0.0, %v440
    %v442 = vpop.f32.mrb[0].mxu0
    %443 = vmatprep.mubr.bf16.mxu0 0
    %444 = vmatmul.mubr.bf16.gmra.mrb[0].mxu0 %v286
    %v445 = vpop.f32.mrb[0].mxu0
    %v446 = vadd.f32 0.0, %v445
    %v447 = vpop.f32.mrb[0].mxu0
    %v448 = vpop.f32.mrb[0].mxu0
    %v449 = vadd.f32 0.0, %v448
    %v450 = vpop.f32.mrb[0].mxu0
    %451 = vmatprep.mubr.bf16.mxu0 0
    %452 = vmatmul.mubr.bf16.gmra.mrb[0].mxu0 %v289
    %v453 = vpop.f32.mrb[0].mxu0
    %v454 = vadd.f32 0.0, %v453
    %v455 = vpop.f32.mrb[0].mxu0
    %v456 = vpop.f32.mrb[0].mxu0
    %v457 = vadd.f32 0.0, %v456
    %v458 = vpop.f32.mrb[0].mxu0
    %459 = vmatprep.mubr.bf16.mxu0 0
    %460 = vmatmul.mubr.bf16.gmra.mrb[0].mxu0 %v292
    %v461 = vpop.f32.mrb[0].mxu0
    %v462 = vadd.f32 0.0, %v461
    %v463 = vpop.f32.mrb[0].mxu0
    %v464 = vpop.f32.mrb[0].mxu0
    %v465 = vadd.f32 0.0, %v464
    %v466 = vpop.f32.mrb[0].mxu0
    %467 = vmatprep.mubr.bf16.mxu0 0
    %468 = vmatmul.mubr.bf16.gmra.mrb[0].mxu0 %v295
    %v469 = vpop.f32.mrb[0].mxu0
    %v470 = vadd.f32 0.0, %v469
    %v471 = vpop.f32.mrb[0].mxu0
    %v472 = vpop.f32.mrb[0].mxu0
    %v473 = vadd.f32 0.0, %v472
    %v474 = vpop.f32.mrb[0].mxu0
    %475 = vmatprep.mubr.bf16.mxu0 0
    %476 = vmatmul.mubr.bf16.gmra.mrb[0].mxu0 %v298
    %v477 = vpop.f32.mrb[0].mxu0
    %v478 = vadd.f32 0.0, %v477
    %v479 = vpop.f32.mrb[0].mxu0
    %v480 = vpop.f32.mrb[0].mxu0
    %v481 = vadd.f32 0.0, %v480
    %v482 = vpop.f32.mrb[0].mxu0
    %483 = vmatprep.mubr.bf16.mxu0 0
    %484 = vmatmul.mubr.bf16.gmra.mrb[0].mxu0 %v301
    %v485 = vpop.f32.mrb[0].mxu0
    %v486 = vadd.f32 0.0, %v485
    %v487 = vpop.f32.mrb[0].mxu0
    %v488 = vpop.f32.mrb[0].mxu0
    %v489 = vadd.f32 0.0, %v488
    %v490 = vpop.f32.mrb[0].mxu0
    %491 = vmatprep.mubr.bf16.mxu0 0
    %492 = vmatmul.mubr.bf16.gmra.mrb[0].mxu0 %v304
    %v493 = vpop.f32.mrb[0].mxu0
    %v494 = vadd.f32 0.0, %v493
    %v495 = vpop.f32.mrb[0].mxu0
    %v496 = vpop.f32.mrb[0].mxu0
    %v497 = vadd.f32 0.0, %v496
    %v498 = vpop.f32.mrb[0].mxu0
    %499 = vmatprep.mubr.bf16.mxu0 0
    %500 = vmatmul.mubr.bf16.gmra.mrb[0].mxu0 %v307
    %v501 = vpop.f32.mrb[0].mxu0
    %v502 = vadd.f32 0.0, %v501
    %v503 = vpop.f32.mrb[0].mxu0
    %v504 = vpop.f32.mrb[0].mxu0
    %v505 = vadd.f32 0.0, %v504
    %v506 = vpop.f32.mrb[0].mxu0
    %507 = vmatprep.mubr.bf16.mxu0 0
    %508 = vmatmul.mubr.bf16.gmra.mrb[0].mxu0 %v310
    %v509 = vpop.f32.mrb[0].mxu0
    %v510 = vadd.f32 0.0, %v509
    %v511 = vpop.f32.mrb[0].mxu0
    %v512 = vpop.f32.mrb[0].mxu0
    %v513 = vadd.f32 0.0, %v512
    %v514 = vpop.f32.mrb[0].mxu0
    %515 = vmatprep.mubr.bf16.mxu0 0
    %516 = vmatmul.mubr.bf16.gmra.mrb[0].mxu0 %v313
    %v517 = vpop.f32.mrb[0].mxu0
    %v518 = vadd.f32 0.0, %v517
    %v519 = vpop.f32.mrb[0].mxu0
    %v520 = vpop.f32.mrb[0].mxu0
    %v521 = vadd.f32 0.0, %v520
    %v522 = vpop.f32.mrb[0].mxu0
    %523 = vmatprep.mubr.bf16.mxu0 0
    %524 = vmatmul.mubr.bf16.gmra.mrb[0].mxu0 %v316
    %v525 = vpop.f32.mrb[0].mxu0
    %v526 = vadd.f32 0.0, %v525
    %v527 = vpop.f32.mrb[0].mxu0
    %v528 = vpop.f32.mrb[0].mxu0
    %v529 = vadd.f32 0.0, %v528
    %v530 = vpop.f32.mrb[0].mxu0
    %531 = vmatprep.mubr.bf16.mxu0 0
    %532 = vmatmul.mubr.bf16.gmra.mrb[0].mxu0 %v319
    %v533 = vpop.f32.mrb[0].mxu0
    %v534 = vadd.f32 0.0, %v533
    %v535 = vpop.f32.mrb[0].mxu0
    %v536 = vpop.f32.mrb[0].mxu0
    %v537 = vadd.f32 0.0, %v536
    %v538 = vpop.f32.mrb[0].mxu0
    %539 = vmatprep.mubr.bf16.mxu0 0
    %540 = vmatmul.mubr.bf16.gmra.mrb[0].mxu0 %v322
    %v541 = vpop.f32.mrb[0].mxu0
    %v542 = vadd.f32 0.0, %v541
    %v543 = vpop.f32.mrb[0].mxu0
    %v544 = vpop.f32.mrb[0].mxu0
    %v545 = vadd.f32 0.0, %v544
    %v546 = vpop.f32.mrb[0].mxu0
    %547 = vmatprep.mubr.bf16.mxu0 0
    %548 = vmatmul.mubr.bf16.gmra.mrb[0].mxu0 %v325
    %v549 = vpop.f32.mrb[0].mxu0
    %v550 = vadd.f32 0.0, %v549
    %v551 = vpop.f32.mrb[0].mxu0
    %v552 = vpop.f32.mrb[0].mxu0
    %v553 = vadd.f32 0.0, %v552
    %v554 = vpop.f32.mrb[0].mxu0
    %555 = vmatprep.mubr.bf16.mxu0 0
    %556 = vmatmul.mubr.bf16.gmra.mrb[0].mxu0 %v328
    %v557 = vpop.f32.mrb[0].mxu0
    %v558 = vadd.f32 0.0, %v557
    %v559 = vpop.f32.mrb[0].mxu0
    %v560 = vpop.f32.mrb[0].mxu0
    %v561 = vadd.f32 0.0, %v560
    %v562 = vpop.f32.mrb[0].mxu0
    %563 = vmatprep.mubr.bf16.mxu0 0
    %564 = vmatmul.mubr.bf16.gmra.mrb[0].mxu0 %v331
    %v565 = vpop.f32.mrb[0].mxu0
    %v566 = vadd.f32 0.0, %v565
    %v567 = vpop.f32.mrb[0].mxu0
    %v568 = vpop.f32.mrb[0].mxu0
    %v569 = vadd.f32 0.0, %v568
    %v570 = vpop.f32.mrb[0].mxu0
    %571 = vmatprep.mubr.bf16.mxu0 0
    %572 = vmatmul.mubr.bf16.gmra.mrb[0].mxu0 %v334
    %v573 = vpop.f32.mrb[0].mxu0
    %v574 = vadd.f32 0.0, %v573
    %v575 = vpop.f32.mrb[0].mxu0
    %v576 = vpop.f32.mrb[0].mxu0
    %v577 = vadd.f32 0.0, %v576
    %v578 = vpop.f32.mrb[0].mxu0
    %579 = vmatprep.mubr.bf16.mxu0 0
    %580 = vmatmul.mubr.bf16.gmra.mrb[0].mxu0 %v337
    %v581 = vpop.f32.mrb[0].mxu0
    %v582 = vadd.f32 0.0, %v581
    %v583 = vpop.f32.mrb[0].mxu0
    %v584 = vpop.f32.mrb[0].mxu0
    %v585 = vadd.f32 0.0, %v584
    %v586 = vpop.f32.mrb[0].mxu0
    %587 = vmatprep.mubr.bf16.mxu0 0
    %588 = vmatmul.mubr.bf16.gmra.mrb[0].mxu0 %v340
    %v589 = vpop.f32.mrb[0].mxu0
    %v590 = vadd.f32 0.0, %v589
    %v591 = vpop.f32.mrb[0].mxu0
    %v592 = vpop.f32.mrb[0].mxu0
    %v593 = vadd.f32 0.0, %v592
    %v594 = vpop.f32.mrb[0].mxu0
    %595 = vmatprep.mubr.bf16.mxu0 0
    %596 = vmatmul.mubr.bf16.gmra.mrb[0].mxu0 %v343
    %v597 = vpop.f32.mrb[0].mxu0
    %v598 = vadd.f32 0.0, %v597
    %v599 = vpop.f32.mrb[0].mxu0
    %v600 = vpop.f32.mrb[0].mxu0
    %v601 = vadd.f32 0.0, %v600
    %v602 = vpop.f32.mrb[0].mxu0
    %603 = vmatprep.mubr.bf16.mxu0 0
    %604 = vmatmul.mubr.bf16.gmra.mrb[0].mxu0 %v346
    %v605 = vpop.f32.mrb[0].mxu0
    %v606 = vadd.f32 0.0, %v605
    %v607 = vpop.f32.mrb[0].mxu0
    %v608 = vpop.f32.mrb[0].mxu0
    %v609 = vadd.f32 0.0, %v608
    %v610 = vpop.f32.mrb[0].mxu0
    %611 = vmatprep.mubr.bf16.mxu0 0
    %612 = vmatmul.mubr.bf16.gmra.mrb[0].mxu0 %v349
    %v613 = vpop.f32.mrb[0].mxu0
    %v614 = vadd.f32 0.0, %v613
    %v615 = vpop.f32.mrb[0].mxu0
    %v616 = vpop.f32.mrb[0].mxu0
    %v617 = vadd.f32 0.0, %v616
    %v618 = vpop.f32.mrb[0].mxu0
    %619 = vmatprep.mubr.bf16.mxu0 0
    %620 = vmatmul.mubr.bf16.gmra.mrb[0].mxu0 %v352
    %v621 = vpop.f32.mrb[0].mxu0
    %v622 = vadd.f32 0.0, %v621
    %v623 = vpop.f32.mrb[0].mxu0
    %v624 = vpop.f32.mrb[0].mxu0
    %v625 = vadd.f32 0.0, %v624
    %v626 = vpop.f32.mrb[0].mxu0
    %627 = vmatprep.mubr.bf16.mxu0 0
    %628 = vmatmul.mubr.bf16.gmra.mrb[0].mxu0 %v355
    %v629 = vpop.f32.mrb[0].mxu0
    %v630 = vadd.f32 0.0, %v629
    %v631 = vpop.f32.mrb[0].mxu0
    %v632 = vpop.f32.mrb[0].mxu0
    %v633 = vadd.f32 0.0, %v632
    %v634 = vpop.f32.mrb[0].mxu0
    %635 = vmatprep.mubr.bf16.mxu0 0
    %636 = vmatmul.mubr.bf16.gmra.mrb[0].mxu0 %v358
    %v637 = vpop.f32.mrb[0].mxu0
    %v638 = vadd.f32 0.0, %v637
    %v639 = vpop.f32.mrb[0].mxu0
    %v640 = vpop.f32.mrb[0].mxu0
    %v641 = vadd.f32 0.0, %v640
    %v642 = vpop.f32.mrb[0].mxu0
    %643 = vmatprep.mubr.bf16.mxu0 0
    %644 = vmatmul.mubr.bf16.gmra.mrb[0].mxu0 %v361
    %v645 = vpop.f32.mrb[0].mxu0
    %v646 = vadd.f32 0.0, %v645
    %v647 = vpop.f32.mrb[0].mxu0
    %v648 = vpop.f32.mrb[0].mxu0
    %v649 = vadd.f32 0.0, %v648
    %v650 = vpop.f32.mrb[0].mxu0
    %651 = vdwg.mxu0
    %v668 = vunpack.c.l.b16 %v218
    %v669 = vunpack.c.l.b16 %v219
    %v670 = vunpack.c.l.b16 %v220
    %v671 = vunpack.c.l.b16 %v221
    %v672 = vunpack.c.l.b16 %v222
    %v673 = vunpack.c.l.b16 %v223
    %v674 = vunpack.c.l.b16 %v224
    %v675 = vunpack.c.l.b16 %v225
    %v676 = vunpack.c.l.b16 %v226
    %v677 = vunpack.c.l.b16 %v227
    %v678 = vunpack.c.l.b16 %v228
    %v679 = vunpack.c.l.b16 %v229
    %v680 = vunpack.c.l.b16 %v230
    %v681 = vunpack.c.l.b16 %v231
    %v682 = vunpack.c.l.b16 %v232
    %v683 = vunpack.c.l.b16 %v233
    %v684 = vpack.c.b16 %v669, %v668
    %v685 = vpack.c.b16 %v671, %v670
    %v686 = vpack.c.b16 %v673, %v672
    %v687 = vpack.c.b16 %v675, %v674
    %v688 = vpack.c.b16 %v677, %v676
    %v689 = vpack.c.b16 %v679, %v678
    %v690 = vpack.c.b16 %v681, %v680
    %v691 = vpack.c.b16 %v683, %v682
    %700 = vmatprep.subr.bf16.mxu0 0
    %701 = vmatpush1.bf16.msra.mxu0 %v684
    %702 = vmatprep.subr.bf16.mxu0 0
    %703 = vmatpush1.bf16.msra.mxu0 %v685
    %704 = vmatprep.subr.bf16.mxu0 0
    %705 = vmatpush1.bf16.msra.mxu0 %v686
    %706 = vmatprep.subr.bf16.mxu0 0
    %707 = vmatpush1.bf16.msra.mxu0 %v687
    %708 = vmatprep.subr.bf16.mxu0 0
    %709 = vmatpush1.bf16.msra.mxu0 %v688
    %710 = vmatprep.subr.bf16.mxu0 0
    %711 = vmatpush1.bf16.msra.mxu0 %v689
    %712 = vmatprep.subr.bf16.mxu0 0
    %713 = vmatpush1.bf16.msra.mxu0 %v690
    %714 = vmatprep.subr.bf16.mxu0 0
    %715 = vmatpush1.bf16.msra.mxu0 %v691
    %716 = vmatprep.subr.bf16.mxu0 0
    %717 = vmatpush1.bf16.msra.mxu0 0
    %718 = vmatprep.subr.bf16.mxu0 0
    %719 = vmatpush1.bf16.msra.mxu0 0
    %720 = vmatprep.subr.bf16.mxu0 0
    %721 = vmatpush1.bf16.msra.mxu0 0
    %722 = vmatprep.subr.bf16.mxu0 0
    %723 = vmatpush1.bf16.msra.mxu0 0
    %724 = vmatprep.subr.bf16.mxu0 0
    %725 = vmatpush1.bf16.msra.mxu0 0
    %726 = vmatprep.subr.bf16.mxu0 0
    %727 = vmatpush1.bf16.msra.mxu0 0
    %728 = vmatprep.subr.bf16.mxu0 0
    %729 = vmatpush1.bf16.msra.mxu0 0
    %730 = vmatprep.subr.bf16.mxu0 0
    %731 = vmatpush1.bf16.msra.mxu0 0
    %732 = vmatprep.mubr.bf16.mxu0 0
    %733 = vmatmul.mubr.bf16.gmra.mrb[0].mxu0 %v90
    %v734 = vpop.f32.mrb[0].mxu0
    %v735 = vadd.f32 %v398, %v734
    %v736 = vpop.f32.mrb[0].mxu0
    %v737 = vpop.f32.mrb[0].mxu0
    %v738 = vadd.f32 %v401, %v737
    %v739 = vpop.f32.mrb[0].mxu0
    %740 = vmatprep.mubr.bf16.mxu0 0
    %741 = vmatmul.mubr.bf16.gmra.mrb[0].mxu0 %v91
    %v742 = vpop.f32.mrb[0].mxu0
    %v743 = vadd.f32 %v406, %v742
    %v744 = vpop.f32.mrb[0].mxu0
    %v745 = vpop.f32.mrb[0].mxu0
    %v746 = vadd.f32 %v409, %v745
    %v747 = vpop.f32.mrb[0].mxu0
    %748 = vmatprep.mubr.bf16.mxu0 0
    %749 = vmatmul.mubr.bf16.gmra.mrb[0].mxu0 %v92
    %v750 = vpop.f32.mrb[0].mxu0
    %v751 = vadd.f32 %v414, %v750
    %v752 = vpop.f32.mrb[0].mxu0
    %v753 = vpop.f32.mrb[0].mxu0
    %v754 = vadd.f32 %v417, %v753
    %v755 = vpop.f32.mrb[0].mxu0
    %756 = vmatprep.mubr.bf16.mxu0 0
    %757 = vmatmul.mubr.bf16.gmra.mrb[0].mxu0 %v93
    %v758 = vpop.f32.mrb[0].mxu0
    %v759 = vadd.f32 %v422, %v758
    %v760 = vpop.f32.mrb[0].mxu0
    %v761 = vpop.f32.mrb[0].mxu0
    %v762 = vadd.f32 %v425, %v761
    %v763 = vpop.f32.mrb[0].mxu0
    %764 = vmatprep.mubr.bf16.mxu0 0
    %765 = vmatmul.mubr.bf16.gmra.mrb[0].mxu0 %v94
    %v766 = vpop.f32.mrb[0].mxu0
    %v767 = vadd.f32 %v430, %v766
    %v768 = vpop.f32.mrb[0].mxu0
    %v769 = vpop.f32.mrb[0].mxu0
    %v770 = vadd.f32 %v433, %v769
    %v771 = vpop.f32.mrb[0].mxu0
    %772 = vmatprep.mubr.bf16.mxu0 0
    %773 = vmatmul.mubr.bf16.gmra.mrb[0].mxu0 %v95
    %v774 = vpop.f32.mrb[0].mxu0
    %v775 = vadd.f32 %v438, %v774
    %v776 = vpop.f32.mrb[0].mxu0
    %v777 = vpop.f32.mrb[0].mxu0
    %v778 = vadd.f32 %v441, %v777
    %v779 = vpop.f32.mrb[0].mxu0
    %780 = vmatprep.mubr.bf16.mxu0 0
    %781 = vmatmul.mubr.bf16.gmra.mrb[0].mxu0 %v96
    %v782 = vpop.f32.mrb[0].mxu0
    %v783 = vadd.f32 %v446, %v782
    %v784 = vpop.f32.mrb[0].mxu0
    %v785 = vpop.f32.mrb[0].mxu0
    %v786 = vadd.f32 %v449, %v785
    %v787 = vpop.f32.mrb[0].mxu0
    %788 = vmatprep.mubr.bf16.mxu0 0
    %789 = vmatmul.mubr.bf16.gmra.mrb[0].mxu0 %v97
    %v790 = vpop.f32.mrb[0].mxu0
    %v791 = vadd.f32 %v454, %v790
    %v792 = vpop.f32.mrb[0].mxu0
    %v793 = vpop.f32.mrb[0].mxu0
    %v794 = vadd.f32 %v457, %v793
    %v795 = vpop.f32.mrb[0].mxu0
    %796 = vmatprep.mubr.bf16.mxu0 0
    %797 = vmatmul.mubr.bf16.gmra.mrb[0].mxu0 %v98
    %v798 = vpop.f32.mrb[0].mxu0
    %v799 = vadd.f32 %v462, %v798
    %v800 = vpop.f32.mrb[0].mxu0
    %v801 = vpop.f32.mrb[0].mxu0
    %v802 = vadd.f32 %v465, %v801
    %v803 = vpop.f32.mrb[0].mxu0
    %804 = vmatprep.mubr.bf16.mxu0 0
    %805 = vmatmul.mubr.bf16.gmra.mrb[0].mxu0 %v99
    %v806 = vpop.f32.mrb[0].mxu0
    %v807 = vadd.f32 %v470, %v806
    %v808 = vpop.f32.mrb[0].mxu0
    %v809 = vpop.f32.mrb[0].mxu0
    %v810 = vadd.f32 %v473, %v809
    %v811 = vpop.f32.mrb[0].mxu0
    %812 = vmatprep.mubr.bf16.mxu0 0
    %813 = vmatmul.mubr.bf16.gmra.mrb[0].mxu0 %v100
    %v814 = vpop.f32.mrb[0].mxu0
    %v815 = vadd.f32 %v478, %v814
    %v816 = vpop.f32.mrb[0].mxu0
    %v817 = vpop.f32.mrb[0].mxu0
    %v818 = vadd.f32 %v481, %v817
    %v819 = vpop.f32.mrb[0].mxu0
    %820 = vmatprep.mubr.bf16.mxu0 0
    %821 = vmatmul.mubr.bf16.gmra.mrb[0].mxu0 %v101
    %v822 = vpop.f32.mrb[0].mxu0
    %v823 = vadd.f32 %v486, %v822
    %v824 = vpop.f32.mrb[0].mxu0
    %v825 = vpop.f32.mrb[0].mxu0
    %v826 = vadd.f32 %v489, %v825
    %v827 = vpop.f32.mrb[0].mxu0
    %828 = vmatprep.mubr.bf16.mxu0 0
    %829 = vmatmul.mubr.bf16.gmra.mrb[0].mxu0 %v102
    %v830 = vpop.f32.mrb[0].mxu0
    %v831 = vadd.f32 %v494, %v830
    %v832 = vpop.f32.mrb[0].mxu0
    %v833 = vpop.f32.mrb[0].mxu0
    %v834 = vadd.f32 %v497, %v833
    %v835 = vpop.f32.mrb[0].mxu0
    %836 = vmatprep.mubr.bf16.mxu0 0
    %837 = vmatmul.mubr.bf16.gmra.mrb[0].mxu0 %v103
    %v838 = vpop.f32.mrb[0].mxu0
    %v839 = vadd.f32 %v502, %v838
    %v840 = vpop.f32.mrb[0].mxu0
    %v841 = vpop.f32.mrb[0].mxu0
    %v842 = vadd.f32 %v505, %v841
    %v843 = vpop.f32.mrb[0].mxu0
    %844 = vmatprep.mubr.bf16.mxu0 0
    %845 = vmatmul.mubr.bf16.gmra.mrb[0].mxu0 %v104
    %v846 = vpop.f32.mrb[0].mxu0
    %v847 = vadd.f32 %v510, %v846
    %v848 = vpop.f32.mrb[0].mxu0
    %v849 = vpop.f32.mrb[0].mxu0
    %v850 = vadd.f32 %v513, %v849
    %v851 = vpop.f32.mrb[0].mxu0
    %852 = vmatprep.mubr.bf16.mxu0 0
    %853 = vmatmul.mubr.bf16.gmra.mrb[0].mxu0 %v105
    %v854 = vpop.f32.mrb[0].mxu0
    %v855 = vadd.f32 %v518, %v854
    %v856 = vpop.f32.mrb[0].mxu0
    %v857 = vpop.f32.mrb[0].mxu0
    %v858 = vadd.f32 %v521, %v857
    %v859 = vpop.f32.mrb[0].mxu0
    %860 = vmatprep.mubr.bf16.mxu0 0
    %861 = vmatmul.mubr.bf16.gmra.mrb[0].mxu0 %v106
    %v862 = vpop.f32.mrb[0].mxu0
    %v863 = vadd.f32 %v526, %v862
    %v864 = vpop.f32.mrb[0].mxu0
    %v865 = vpop.f32.mrb[0].mxu0
    %v866 = vadd.f32 %v529, %v865
    %v867 = vpop.f32.mrb[0].mxu0
    %868 = vmatprep.mubr.bf16.mxu0 0
    %869 = vmatmul.mubr.bf16.gmra.mrb[0].mxu0 %v107
    %v870 = vpop.f32.mrb[0].mxu0
    %v871 = vadd.f32 %v534, %v870
    %v872 = vpop.f32.mrb[0].mxu0
    %v873 = vpop.f32.mrb[0].mxu0
    %v874 = vadd.f32 %v537, %v873
    %v875 = vpop.f32.mrb[0].mxu0
    %876 = vmatprep.mubr.bf16.mxu0 0
    %877 = vmatmul.mubr.bf16.gmra.mrb[0].mxu0 %v108
    %v878 = vpop.f32.mrb[0].mxu0
    %v879 = vadd.f32 %v542, %v878
    %v880 = vpop.f32.mrb[0].mxu0
    %v881 = vpop.f32.mrb[0].mxu0
    %v882 = vadd.f32 %v545, %v881
    %v883 = vpop.f32.mrb[0].mxu0
    %884 = vmatprep.mubr.bf16.mxu0 0
    %885 = vmatmul.mubr.bf16.gmra.mrb[0].mxu0 %v109
    %v886 = vpop.f32.mrb[0].mxu0
    %v887 = vadd.f32 %v550, %v886
    %v888 = vpop.f32.mrb[0].mxu0
    %v889 = vpop.f32.mrb[0].mxu0
    %v890 = vadd.f32 %v553, %v889
    %v891 = vpop.f32.mrb[0].mxu0
    %892 = vmatprep.mubr.bf16.mxu0 0
    %893 = vmatmul.mubr.bf16.gmra.mrb[0].mxu0 %v110
    %v894 = vpop.f32.mrb[0].mxu0
    %v895 = vadd.f32 %v558, %v894
    %v896 = vpop.f32.mrb[0].mxu0
    %v897 = vpop.f32.mrb[0].mxu0
    %v898 = vadd.f32 %v561, %v897
    %v899 = vpop.f32.mrb[0].mxu0
    %900 = vmatprep.mubr.bf16.mxu0 0
    %901 = vmatmul.mubr.bf16.gmra.mrb[0].mxu0 %v111
    %v902 = vpop.f32.mrb[0].mxu0
    %v903 = vadd.f32 %v566, %v902
    %v904 = vpop.f32.mrb[0].mxu0
    %v905 = vpop.f32.mrb[0].mxu0
    %v906 = vadd.f32 %v569, %v905
    %v907 = vpop.f32.mrb[0].mxu0
    %908 = vmatprep.mubr.bf16.mxu0 0
    %909 = vmatmul.mubr.bf16.gmra.mrb[0].mxu0 %v112
    %v910 = vpop.f32.mrb[0].mxu0
    %v911 = vadd.f32 %v574, %v910
    %v912 = vpop.f32.mrb[0].mxu0
    %v913 = vpop.f32.mrb[0].mxu0
    %v914 = vadd.f32 %v577, %v913
    %v915 = vpop.f32.mrb[0].mxu0
    %916 = vmatprep.mubr.bf16.mxu0 0
    %917 = vmatmul.mubr.bf16.gmra.mrb[0].mxu0 %v113
    %v918 = vpop.f32.mrb[0].mxu0
    %v919 = vadd.f32 %v582, %v918
    %v920 = vpop.f32.mrb[0].mxu0
    %v921 = vpop.f32.mrb[0].mxu0
    %v922 = vadd.f32 %v585, %v921
    %v923 = vpop.f32.mrb[0].mxu0
    %924 = vmatprep.mubr.bf16.mxu0 0
    %925 = vmatmul.mubr.bf16.gmra.mrb[0].mxu0 %v114
    %v926 = vpop.f32.mrb[0].mxu0
    %v927 = vadd.f32 %v590, %v926
    %v928 = vpop.f32.mrb[0].mxu0
    %v929 = vpop.f32.mrb[0].mxu0
    %v930 = vadd.f32 %v593, %v929
    %v931 = vpop.f32.mrb[0].mxu0
    %932 = vmatprep.mubr.bf16.mxu0 0
    %933 = vmatmul.mubr.bf16.gmra.mrb[0].mxu0 %v115
    %v934 = vpop.f32.mrb[0].mxu0
    %v935 = vadd.f32 %v598, %v934
    %v936 = vpop.f32.mrb[0].mxu0
    %v937 = vpop.f32.mrb[0].mxu0
    %v938 = vadd.f32 %v601, %v937
    %v939 = vpop.f32.mrb[0].mxu0
    %940 = vmatprep.mubr.bf16.mxu0 0
    %941 = vmatmul.mubr.bf16.gmra.mrb[0].mxu0 %v116
    %v942 = vpop.f32.mrb[0].mxu0
    %v943 = vadd.f32 %v606, %v942
    %v944 = vpop.f32.mrb[0].mxu0
    %v945 = vpop.f32.mrb[0].mxu0
    %v946 = vadd.f32 %v609, %v945
    %v947 = vpop.f32.mrb[0].mxu0
    %948 = vmatprep.mubr.bf16.mxu0 0
    %949 = vmatmul.mubr.bf16.gmra.mrb[0].mxu0 %v117
    %v950 = vpop.f32.mrb[0].mxu0
    %v951 = vadd.f32 %v614, %v950
    %v952 = vpop.f32.mrb[0].mxu0
    %v953 = vpop.f32.mrb[0].mxu0
    %v954 = vadd.f32 %v617, %v953
    %v955 = vpop.f32.mrb[0].mxu0
    %956 = vmatprep.mubr.bf16.mxu0 0
    %957 = vmatmul.mubr.bf16.gmra.mrb[0].mxu0 %v118
    %v958 = vpop.f32.mrb[0].mxu0
    %v959 = vadd.f32 %v622, %v958
    %v960 = vpop.f32.mrb[0].mxu0
    %v961 = vpop.f32.mrb[0].mxu0
    %v962 = vadd.f32 %v625, %v961
    %v963 = vpop.f32.mrb[0].mxu0
    %964 = vmatprep.mubr.bf16.mxu0 0
    %965 = vmatmul.mubr.bf16.gmra.mrb[0].mxu0 %v119
    %v966 = vpop.f32.mrb[0].mxu0
    %v967 = vadd.f32 %v630, %v966
    %v968 = vpop.f32.mrb[0].mxu0
    %v969 = vpop.f32.mrb[0].mxu0
    %v970 = vadd.f32 %v633, %v969
    %v971 = vpop.f32.mrb[0].mxu0
    %972 = vmatprep.mubr.bf16.mxu0 0
    %973 = vmatmul.mubr.bf16.gmra.mrb[0].mxu0 %v120
    %v974 = vpop.f32.mrb[0].mxu0
    %v975 = vadd.f32 %v638, %v974
    %v976 = vpop.f32.mrb[0].mxu0
    %v977 = vpop.f32.mrb[0].mxu0
    %v978 = vadd.f32 %v641, %v977
    %v979 = vpop.f32.mrb[0].mxu0
    %980 = vmatprep.mubr.bf16.mxu0 0
    %981 = vmatmul.mubr.bf16.gmra.mrb[0].mxu0 %v121
    %v982 = vpop.f32.mrb[0].mxu0
    %v983 = vadd.f32 %v646, %v982
    %v984 = vpop.f32.mrb[0].mxu0
    %v985 = vpop.f32.mrb[0].mxu0
    %v986 = vadd.f32 %v649, %v985
    %v987 = vpop.f32.mrb[0].mxu0
    %988 = vdwg.mxu0
    %s989 = sld [smem:[#allocation2]]
    %vm990 = vcmp.ge.f32.partialorder %v735, 0.0
    %vm991 = vcmp.ge.f32.partialorder %v738, 0.0
    %vm992 = vcmp.ge.f32.partialorder %v743, 0.0
    %vm993 = vcmp.ge.f32.partialorder %v746, 0.0
    %vm994 = vcmp.ge.f32.partialorder %v751, 0.0
    %vm995 = vcmp.ge.f32.partialorder %v754, 0.0
    %vm996 = vcmp.ge.f32.partialorder %v759, 0.0
    %vm997 = vcmp.ge.f32.partialorder %v762, 0.0
    %vm998 = vcmp.ge.f32.partialorder %v767, 0.0
    %vm999 = vcmp.ge.f32.partialorder %v770, 0.0
    %vm1000 = vcmp.ge.f32.partialorder %v775, 0.0
    %vm1001 = vcmp.ge.f32.partialorder %v778, 0.0
    %vm1002 = vcmp.ge.f32.partialorder %v783, 0.0
    %vm1003 = vcmp.ge.f32.partialorder %v786, 0.0
    %vm1004 = vcmp.ge.f32.partialorder %v791, 0.0
    %vm1005 = vcmp.ge.f32.partialorder %v794, 0.0
    %vm1006 = vcmp.ge.f32.partialorder %v799, 0.0
    %vm1007 = vcmp.ge.f32.partialorder %v802, 0.0
    %vm1008 = vcmp.ge.f32.partialorder %v807, 0.0
    %vm1009 = vcmp.ge.f32.partialorder %v810, 0.0
    %vm1010 = vcmp.ge.f32.partialorder %v815, 0.0
    %vm1011 = vcmp.ge.f32.partialorder %v818, 0.0
    %vm1012 = vcmp.ge.f32.partialorder %v823, 0.0
    %vm1013 = vcmp.ge.f32.partialorder %v826, 0.0
    %vm1014 = vcmp.ge.f32.partialorder %v831, 0.0
    %vm1015 = vcmp.ge.f32.partialorder %v834, 0.0
    %vm1016 = vcmp.ge.f32.partialorder %v839, 0.0
    %vm1017 = vcmp.ge.f32.partialorder %v842, 0.0
    %vm1018 = vcmp.ge.f32.partialorder %v847, 0.0
    %vm1019 = vcmp.ge.f32.partialorder %v850, 0.0
    %vm1020 = vcmp.ge.f32.partialorder %v855, 0.0
    %vm1021 = vcmp.ge.f32.partialorder %v858, 0.0
    %vm1022 = vcmp.ge.f32.partialorder %v863, 0.0
    %vm1023 = vcmp.ge.f32.partialorder %v866, 0.0
    %vm1024 = vcmp.ge.f32.partialorder %v871, 0.0
    %vm1025 = vcmp.ge.f32.partialorder %v874, 0.0
    %vm1026 = vcmp.ge.f32.partialorder %v879, 0.0
    %vm1027 = vcmp.ge.f32.partialorder %v882, 0.0
    %vm1028 = vcmp.ge.f32.partialorder %v887, 0.0
    %vm1029 = vcmp.ge.f32.partialorder %v890, 0.0
    %vm1030 = vcmp.ge.f32.partialorder %v895, 0.0
    %vm1031 = vcmp.ge.f32.partialorder %v898, 0.0
    %vm1032 = vcmp.ge.f32.partialorder %v903, 0.0
    %vm1033 = vcmp.ge.f32.partialorder %v906, 0.0
    %vm1034 = vcmp.ge.f32.partialorder %v911, 0.0
    %vm1035 = vcmp.ge.f32.partialorder %v914, 0.0
    %vm1036 = vcmp.ge.f32.partialorder %v919, 0.0
    %vm1037 = vcmp.ge.f32.partialorder %v922, 0.0
    %vm1038 = vcmp.ge.f32.partialorder %v927, 0.0
    %vm1039 = vcmp.ge.f32.partialorder %v930, 0.0
    %vm1040 = vcmp.ge.f32.partialorder %v935, 0.0
    %vm1041 = vcmp.ge.f32.partialorder %v938, 0.0
    %vm1042 = vcmp.ge.f32.partialorder %v943, 0.0
    %vm1043 = vcmp.ge.f32.partialorder %v946, 0.0
    %vm1044 = vcmp.ge.f32.partialorder %v951, 0.0
    %vm1045 = vcmp.ge.f32.partialorder %v954, 0.0
    %vm1046 = vcmp.ge.f32.partialorder %v959, 0.0
    %vm1047 = vcmp.ge.f32.partialorder %v962, 0.0
    %vm1048 = vcmp.ge.f32.partialorder %v967, 0.0
    %vm1049 = vcmp.ge.f32.partialorder %v970, 0.0
    %vm1050 = vcmp.ge.f32.partialorder %v975, 0.0
    %vm1051 = vcmp.ge.f32.partialorder %v978, 0.0
    %vm1052 = vcmp.ge.f32.partialorder %v983, 0.0
    %vm1053 = vcmp.ge.f32.partialorder %v986, 0.0
    %v1054 = vstv %s989
    %v1055 = vmul.f32 %v1054, %v735
    %v1056 = vmul.f32 %v1054, %v738
    %v1057 = vmul.f32 %v1054, %v743
    %v1058 = vmul.f32 %v1054, %v746
    %v1059 = vmul.f32 %v1054, %v751
    %v1060 = vmul.f32 %v1054, %v754
    %v1061 = vmul.f32 %v1054, %v759
    %v1062 = vmul.f32 %v1054, %v762
    %v1063 = vmul.f32 %v1054, %v767
    %v1064 = vmul.f32 %v1054, %v770
    %v1065 = vmul.f32 %v1054, %v775
    %v1066 = vmul.f32 %v1054, %v778
    %v1067 = vmul.f32 %v1054, %v783
    %v1068 = vmul.f32 %v1054, %v786
    %v1069 = vmul.f32 %v1054, %v791
    %v1070 = vmul.f32 %v1054, %v794
    %v1071 = vmul.f32 %v1054, %v799
    %v1072 = vmul.f32 %v1054, %v802
    %v1073 = vmul.f32 %v1054, %v807
    %v1074 = vmul.f32 %v1054, %v810
    %v1075 = vmul.f32 %v1054, %v815
    %v1076 = vmul.f32 %v1054, %v818
    %v1077 = vmul.f32 %v1054, %v823
    %v1078 = vmul.f32 %v1054, %v826
    %v1079 = vmul.f32 %v1054, %v831
    %v1080 = vmul.f32 %v1054, %v834
    %v1081 = vmul.f32 %v1054, %v839
    %v1082 = vmul.f32 %v1054, %v842
    %v1083 = vmul.f32 %v1054, %v847
    %v1084 = vmul.f32 %v1054, %v850
    %v1085 = vmul.f32 %v1054, %v855
    %v1086 = vmul.f32 %v1054, %v858
    %v1087 = vmul.f32 %v1054, %v863
    %v1088 = vmul.f32 %v1054, %v866
    %v1089 = vmul.f32 %v1054, %v871
    %v1090 = vmul.f32 %v1054, %v874
    %v1091 = vmul.f32 %v1054, %v879
    %v1092 = vmul.f32 %v1054, %v882
    %v1093 = vmul.f32 %v1054, %v887
    %v1094 = vmul.f32 %v1054, %v890
    %v1095 = vmul.f32 %v1054, %v895
    %v1096 = vmul.f32 %v1054, %v898
    %v1097 = vmul.f32 %v1054, %v903
    %v1098 = vmul.f32 %v1054, %v906
    %v1099 = vmul.f32 %v1054, %v911
    %v1100 = vmul.f32 %v1054, %v914
    %v1101 = vmul.f32 %v1054, %v919
    %v1102 = vmul.f32 %v1054, %v922
    %v1103 = vmul.f32 %v1054, %v927
    %v1104 = vmul.f32 %v1054, %v930
    %v1105 = vmul.f32 %v1054, %v935
    %v1106 = vmul.f32 %v1054, %v938
    %v1107 = vmul.f32 %v1054, %v943
    %v1108 = vmul.f32 %v1054, %v946
    %v1109 = vmul.f32 %v1054, %v951
    %v1110 = vmul.f32 %v1054, %v954
    %v1111 = vmul.f32 %v1054, %v959
    %v1112 = vmul.f32 %v1054, %v962
    %v1113 = vmul.f32 %v1054, %v967
    %v1114 = vmul.f32 %v1054, %v970
    %v1115 = vmul.f32 %v1054, %v975
    %v1116 = vmul.f32 %v1054, %v978
    %v1117 = vmul.f32 %v1054, %v983
    %v1118 = vmul.f32 %v1054, %v986
    %v1119 = vsel %vm990, %v735, %v1055
    %v1120 = vsel %vm991, %v738, %v1056
    %v1121 = vsel %vm992, %v743, %v1057
    %v1122 = vsel %vm993, %v746, %v1058
    %v1123 = vsel %vm994, %v751, %v1059
    %v1124 = vsel %vm995, %v754, %v1060
    %v1125 = vsel %vm996, %v759, %v1061
    %v1126 = vsel %vm997, %v762, %v1062
    %v1127 = vsel %vm998, %v767, %v1063
    %v1128 = vsel %vm999, %v770, %v1064
    %v1129 = vsel %vm1000, %v775, %v1065
    %v1130 = vsel %vm1001, %v778, %v1066
    %v1131 = vsel %vm1002, %v783, %v1067
    %v1132 = vsel %vm1003, %v786, %v1068
    %v1133 = vsel %vm1004, %v791, %v1069
    %v1134 = vsel %vm1005, %v794, %v1070
    %v1135 = vsel %vm1006, %v799, %v1071
    %v1136 = vsel %vm1007, %v802, %v1072
    %v1137 = vsel %vm1008, %v807, %v1073
    %v1138 = vsel %vm1009, %v810, %v1074
    %v1139 = vsel %vm1010, %v815, %v1075
    %v1140 = vsel %vm1011, %v818, %v1076
    %v1141 = vsel %vm1012, %v823, %v1077
    %v1142 = vsel %vm1013, %v826, %v1078
    %v1143 = vsel %vm1014, %v831, %v1079
    %v1144 = vsel %vm1015, %v834, %v1080
    %v1145 = vsel %vm1016, %v839, %v1081
    %v1146 = vsel %vm1017, %v842, %v1082
    %v1147 = vsel %vm1018, %v847, %v1083
    %v1148 = vsel %vm1019, %v850, %v1084
    %v1149 = vsel %vm1020, %v855, %v1085
    %v1150 = vsel %vm1021, %v858, %v1086
    %v1151 = vsel %vm1022, %v863, %v1087
    %v1152 = vsel %vm1023, %v866, %v1088
    %v1153 = vsel %vm1024, %v871, %v1089
    %v1154 = vsel %vm1025, %v874, %v1090
    %v1155 = vsel %vm1026, %v879, %v1091
    %v1156 = vsel %vm1027, %v882, %v1092
    %v1157 = vsel %vm1028, %v887, %v1093
    %v1158 = vsel %vm1029, %v890, %v1094
    %v1159 = vsel %vm1030, %v895, %v1095
    %v1160 = vsel %vm1031, %v898, %v1096
    %v1161 = vsel %vm1032, %v903, %v1097
    %v1162 = vsel %vm1033, %v906, %v1098
    %v1163 = vsel %vm1034, %v911, %v1099
    %v1164 = vsel %vm1035, %v914, %v1100
    %v1165 = vsel %vm1036, %v919, %v1101
    %v1166 = vsel %vm1037, %v922, %v1102
    %v1167 = vsel %vm1038, %v927, %v1103
    %v1168 = vsel %vm1039, %v930, %v1104
    %v1169 = vsel %vm1040, %v935, %v1105
    %v1170 = vsel %vm1041, %v938, %v1106
    %v1171 = vsel %vm1042, %v943, %v1107
    %v1172 = vsel %vm1043, %v946, %v1108
    %v1173 = vsel %vm1044, %v951, %v1109
    %v1174 = vsel %vm1045, %v954, %v1110
    %v1175 = vsel %vm1046, %v959, %v1111
    %v1176 = vsel %vm1047, %v962, %v1112
    %v1177 = vsel %vm1048, %v967, %v1113
    %v1178 = vsel %vm1049, %v970, %v1114
    %v1179 = vsel %vm1050, %v975, %v1115
    %v1180 = vsel %vm1051, %v978, %v1116
    %v1181 = vsel %vm1052, %v983, %v1117
    %v1182 = vsel %vm1053, %v986, %v1118
    %v1183 = vpack.c.bf16 %v1120, %v1119
    %v1184 = vpack.c.bf16 %v1122, %v1121
    %v1185 = vpack.c.bf16 %v1124, %v1123
    %v1186 = vpack.c.bf16 %v1126, %v1125
    %v1187 = vpack.c.bf16 %v1128, %v1127
    %v1188 = vpack.c.bf16 %v1130, %v1129
    %v1189 = vpack.c.bf16 %v1132, %v1131
    %v1190 = vpack.c.bf16 %v1134, %v1133
    %v1191 = vpack.c.bf16 %v1136, %v1135
    %v1192 = vpack.c.bf16 %v1138, %v1137
    %v1193 = vpack.c.bf16 %v1140, %v1139
    %v1194 = vpack.c.bf16 %v1142, %v1141
    %v1195 = vpack.c.bf16 %v1144, %v1143
    %v1196 = vpack.c.bf16 %v1146, %v1145
    %v1197 = vpack.c.bf16 %v1148, %v1147
    %v1198 = vpack.c.bf16 %v1150, %v1149
    %v1199 = vpack.c.bf16 %v1152, %v1151
    %v1200 = vpack.c.bf16 %v1154, %v1153
    %v1201 = vpack.c.bf16 %v1156, %v1155
    %v1202 = vpack.c.bf16 %v1158, %v1157
    %v1203 = vpack.c.bf16 %v1160, %v1159
    %v1204 = vpack.c.bf16 %v1162, %v1161
    %v1205 = vpack.c.bf16 %v1164, %v1163
    %v1206 = vpack.c.bf16 %v1166, %v1165
    %v1207 = vpack.c.bf16 %v1168, %v1167
    %v1208 = vpack.c.bf16 %v1170, %v1169
    %v1209 = vpack.c.bf16 %v1172, %v1171
    %v1210 = vpack.c.bf16 %v1174, %v1173
    %v1211 = vpack.c.bf16 %v1176, %v1175
    %v1212 = vpack.c.bf16 %v1178, %v1177
    %v1213 = vpack.c.bf16 %v1180, %v1179
    %v1214 = vpack.c.bf16 %v1182, %v1181
    %v1215 = vld [vmem:[%s5] sm:$0xf]
    %v1216 = vld [vmem:[%s5 + $0x4] sm:$0xf]
    %v1217 = vld [vmem:[%s5 + $0x8] sm:$0xf]
    %v1218 = vld [vmem:[%s5 + $0xc] sm:$0xf]
    %v1219 = vld [vmem:[%s5 + $0x10] sm:$0xf]
    %v1220 = vld [vmem:[%s5 + $0x14] sm:$0xf]
    %v1221 = vld [vmem:[%s5 + $0x18] sm:$0xf]
    %v1222 = vld [vmem:[%s5 + $0x1c] sm:$0xf]
    %v1223 = vld [vmem:[%s5 + $0x20] sm:$0xf]
    %v1224 = vld [vmem:[%s5 + $0x24] sm:$0xf]
    %v1225 = vld [vmem:[%s5 + $0x28] sm:$0xf]
    %v1226 = vld [vmem:[%s5 + $0x2c] sm:$0xf]
    %v1227 = vld [vmem:[%s5 + $0x30] sm:$0xf]
    %v1228 = vld [vmem:[%s5 + $0x34] sm:$0xf]
    %v1229 = vld [vmem:[%s5 + $0x38] sm:$0xf]
    %v1230 = vld [vmem:[%s5 + $0x3c] sm:$0xf]
    %v1247 = vunpack.c.l.b16 %v1215
    %v1248 = vunpack.c.l.b16 %v1216
    %v1249 = vunpack.c.l.b16 %v1217
    %v1250 = vunpack.c.l.b16 %v1218
    %v1251 = vunpack.c.l.b16 %v1219
    %v1252 = vunpack.c.l.b16 %v1220
    %v1253 = vunpack.c.l.b16 %v1221
    %v1254 = vunpack.c.l.b16 %v1222
    %v1255 = vunpack.c.l.b16 %v1223
    %v1256 = vunpack.c.l.b16 %v1224
    %v1257 = vunpack.c.l.b16 %v1225
    %v1258 = vunpack.c.l.b16 %v1226
    %v1259 = vunpack.c.l.b16 %v1227
    %v1260 = vunpack.c.l.b16 %v1228
    %v1261 = vunpack.c.l.b16 %v1229
    %v1262 = vunpack.c.l.b16 %v1230
    %v1263 = vpack.c.b16 %v1248, %v1247
    %v1264 = vpack.c.b16 %v1250, %v1249
    %v1265 = vpack.c.b16 %v1252, %v1251
    %v1266 = vpack.c.b16 %v1254, %v1253
    %v1267 = vpack.c.b16 %v1256, %v1255
    %v1268 = vpack.c.b16 %v1258, %v1257
    %v1269 = vpack.c.b16 %v1260, %v1259
    %v1270 = vpack.c.b16 %v1262, %v1261
    %1279 = vmatprep.subr.bf16.mxu0 0
    %1280 = vmatpush1.bf16.msra.mxu0 %v1263
    %1281 = vmatprep.subr.bf16.mxu0 0
    %1282 = vmatpush1.bf16.msra.mxu0 %v1264
    %1283 = vmatprep.subr.bf16.mxu0 0
    %1284 = vmatpush1.bf16.msra.mxu0 %v1265
    %1285 = vmatprep.subr.bf16.mxu0 0
    %1286 = vmatpush1.bf16.msra.mxu0 %v1266
    %1287 = vmatprep.subr.bf16.mxu0 0
    %1288 = vmatpush1.bf16.msra.mxu0 %v1267
    %1289 = vmatprep.subr.bf16.mxu0 0
    %1290 = vmatpush1.bf16.msra.mxu0 %v1268
    %1291 = vmatprep.subr.bf16.mxu0 0
    %1292 = vmatpush1.bf16.msra.mxu0 %v1269
    %1293 = vmatprep.subr.bf16.mxu0 0
    %1294 = vmatpush1.bf16.msra.mxu0 %v1270
    %1295 = vmatprep.subr.bf16.mxu0 0
    %1296 = vmatpush1.bf16.msra.mxu0 0
    %1297 = vmatprep.subr.bf16.mxu0 0
    %1298 = vmatpush1.bf16.msra.mxu0 0
    %1299 = vmatprep.subr.bf16.mxu0 0
    %1300 = vmatpush1.bf16.msra.mxu0 0
    %1301 = vmatprep.subr.bf16.mxu0 0
    %1302 = vmatpush1.bf16.msra.mxu0 0
    %1303 = vmatprep.subr.bf16.mxu0 0
    %1304 = vmatpush1.bf16.msra.mxu0 0
    %1305 = vmatprep.subr.bf16.mxu0 0
    %1306 = vmatpush1.bf16.msra.mxu0 0
    %1307 = vmatprep.subr.bf16.mxu0 0
    %1308 = vmatpush1.bf16.msra.mxu0 0
    %1309 = vmatprep.subr.bf16.mxu0 0
    %1310 = vmatpush1.bf16.msra.mxu0 0
    %1311 = vmatprep.mubr.bf16.mxu0 0
    %1312 = vmatmul.mubr.bf16.gmra.mrb[0].mxu0 %v1183
    %v1313 = vpop.f32.mrb[0].mxu0
    %v1314 = vadd.f32 0.0, %v1313
    %v1315 = vpop.f32.mrb[0].mxu0
    %v1316 = vpop.f32.mrb[0].mxu0
    %v1317 = vadd.f32 0.0, %v1316
    %v1318 = vpop.f32.mrb[0].mxu0
    %1319 = vmatprep.mubr.bf16.mxu0 0
    %1320 = vmatmul.mubr.bf16.gmra.mrb[0].mxu0 %v1184
    %v1321 = vpop.f32.mrb[0].mxu0
    %v1322 = vadd.f32 0.0, %v1321
    %v1323 = vpop.f32.mrb[0].mxu0
    %v1324 = vpop.f32.mrb[0].mxu0
    %v1325 = vadd.f32 0.0, %v1324
    %v1326 = vpop.f32.mrb[0].mxu0
    %1327 = vmatprep.mubr.bf16.mxu0 0
    %1328 = vmatmul.mubr.bf16.gmra.mrb[0].mxu0 %v1185
    %v1329 = vpop.f32.mrb[0].mxu0
    %v1330 = vadd.f32 0.0, %v1329
    %v1331 = vpop.f32.mrb[0].mxu0
    %v1332 = vpop.f32.mrb[0].mxu0
    %v1333 = vadd.f32 0.0, %v1332
    %v1334 = vpop.f32.mrb[0].mxu0
    %1335 = vmatprep.mubr.bf16.mxu0 0
    %1336 = vmatmul.mubr.bf16.gmra.mrb[0].mxu0 %v1186
    %v1337 = vpop.f32.mrb[0].mxu0
    %v1338 = vadd.f32 0.0, %v1337
    %v1339 = vpop.f32.mrb[0].mxu0
    %v1340 = vpop.f32.mrb[0].mxu0
    %v1341 = vadd.f32 0.0, %v1340
    %v1342 = vpop.f32.mrb[0].mxu0
    %1343 = vmatprep.mubr.bf16.mxu0 0
    %1344 = vmatmul.mubr.bf16.gmra.mrb[0].mxu0 %v1187
    %v1345 = vpop.f32.mrb[0].mxu0
    %v1346 = vadd.f32 0.0, %v1345
    %v1347 = vpop.f32.mrb[0].mxu0
    %v1348 = vpop.f32.mrb[0].mxu0
    %v1349 = vadd.f32 0.0, %v1348
    %v1350 = vpop.f32.mrb[0].mxu0
    %1351 = vmatprep.mubr.bf16.mxu0 0
    %1352 = vmatmul.mubr.bf16.gmra.mrb[0].mxu0 %v1188
    %v1353 = vpop.f32.mrb[0].mxu0
    %v1354 = vadd.f32 0.0, %v1353
    %v1355 = vpop.f32.mrb[0].mxu0
    %v1356 = vpop.f32.mrb[0].mxu0
    %v1357 = vadd.f32 0.0, %v1356
    %v1358 = vpop.f32.mrb[0].mxu0
    %1359 = vmatprep.mubr.bf16.mxu0 0
    %1360 = vmatmul.mubr.bf16.gmra.mrb[0].mxu0 %v1189
    %v1361 = vpop.f32.mrb[0].mxu0
    %v1362 = vadd.f32 0.0, %v1361
    %v1363 = vpop.f32.mrb[0].mxu0
    %v1364 = vpop.f32.mrb[0].mxu0
    %v1365 = vadd.f32 0.0, %v1364
    %v1366 = vpop.f32.mrb[0].mxu0
    %1367 = vmatprep.mubr.bf16.mxu0 0
    %1368 = vmatmul.mubr.bf16.gmra.mrb[0].mxu0 %v1190
    %v1369 = vpop.f32.mrb[0].mxu0
    %v1370 = vadd.f32 0.0, %v1369
    %v1371 = vpop.f32.mrb[0].mxu0
    %v1372 = vpop.f32.mrb[0].mxu0
    %v1373 = vadd.f32 0.0, %v1372
    %v1374 = vpop.f32.mrb[0].mxu0
    %1375 = vmatprep.mubr.bf16.mxu0 0
    %1376 = vmatmul.mubr.bf16.gmra.mrb[0].mxu0 %v1191
    %v1377 = vpop.f32.mrb[0].mxu0
    %v1378 = vadd.f32 0.0, %v1377
    %v1379 = vpop.f32.mrb[0].mxu0
    %v1380 = vpop.f32.mrb[0].mxu0
    %v1381 = vadd.f32 0.0, %v1380
    %v1382 = vpop.f32.mrb[0].mxu0
    %1383 = vmatprep.mubr.bf16.mxu0 0
    %1384 = vmatmul.mubr.bf16.gmra.mrb[0].mxu0 %v1192
    %v1385 = vpop.f32.mrb[0].mxu0
    %v1386 = vadd.f32 0.0, %v1385
    %v1387 = vpop.f32.mrb[0].mxu0
    %v1388 = vpop.f32.mrb[0].mxu0
    %v1389 = vadd.f32 0.0, %v1388
    %v1390 = vpop.f32.mrb[0].mxu0
    %1391 = vmatprep.mubr.bf16.mxu0 0
    %1392 = vmatmul.mubr.bf16.gmra.mrb[0].mxu0 %v1193
    %v1393 = vpop.f32.mrb[0].mxu0
    %v1394 = vadd.f32 0.0, %v1393
    %v1395 = vpop.f32.mrb[0].mxu0
    %v1396 = vpop.f32.mrb[0].mxu0
    %v1397 = vadd.f32 0.0, %v1396
    %v1398 = vpop.f32.mrb[0].mxu0
    %1399 = vmatprep.mubr.bf16.mxu0 0
    %1400 = vmatmul.mubr.bf16.gmra.mrb[0].mxu0 %v1194
    %v1401 = vpop.f32.mrb[0].mxu0
    %v1402 = vadd.f32 0.0, %v1401
    %v1403 = vpop.f32.mrb[0].mxu0
    %v1404 = vpop.f32.mrb[0].mxu0
    %v1405 = vadd.f32 0.0, %v1404
    %v1406 = vpop.f32.mrb[0].mxu0
    %1407 = vmatprep.mubr.bf16.mxu0 0
    %1408 = vmatmul.mubr.bf16.gmra.mrb[0].mxu0 %v1195
    %v1409 = vpop.f32.mrb[0].mxu0
    %v1410 = vadd.f32 0.0, %v1409
    %v1411 = vpop.f32.mrb[0].mxu0
    %v1412 = vpop.f32.mrb[0].mxu0
    %v1413 = vadd.f32 0.0, %v1412
    %v1414 = vpop.f32.mrb[0].mxu0
    %1415 = vmatprep.mubr.bf16.mxu0 0
    %1416 = vmatmul.mubr.bf16.gmra.mrb[0].mxu0 %v1196
    %v1417 = vpop.f32.mrb[0].mxu0
    %v1418 = vadd.f32 0.0, %v1417
    %v1419 = vpop.f32.mrb[0].mxu0
    %v1420 = vpop.f32.mrb[0].mxu0
    %v1421 = vadd.f32 0.0, %v1420
    %v1422 = vpop.f32.mrb[0].mxu0
    %1423 = vmatprep.mubr.bf16.mxu0 0
    %1424 = vmatmul.mubr.bf16.gmra.mrb[0].mxu0 %v1197
    %v1425 = vpop.f32.mrb[0].mxu0
    %v1426 = vadd.f32 0.0, %v1425
    %v1427 = vpop.f32.mrb[0].mxu0
    %v1428 = vpop.f32.mrb[0].mxu0
    %v1429 = vadd.f32 0.0, %v1428
    %v1430 = vpop.f32.mrb[0].mxu0
    %1431 = vmatprep.mubr.bf16.mxu0 0
    %1432 = vmatmul.mubr.bf16.gmra.mrb[0].mxu0 %v1198
    %v1433 = vpop.f32.mrb[0].mxu0
    %v1434 = vadd.f32 0.0, %v1433
    %v1435 = vpop.f32.mrb[0].mxu0
    %v1436 = vpop.f32.mrb[0].mxu0
    %v1437 = vadd.f32 0.0, %v1436
    %v1438 = vpop.f32.mrb[0].mxu0
    %1439 = vmatprep.mubr.bf16.mxu0 0
    %1440 = vmatmul.mubr.bf16.gmra.mrb[0].mxu0 %v1199
    %v1441 = vpop.f32.mrb[0].mxu0
    %v1442 = vadd.f32 0.0, %v1441
    %v1443 = vpop.f32.mrb[0].mxu0
    %v1444 = vpop.f32.mrb[0].mxu0
    %v1445 = vadd.f32 0.0, %v1444
    %v1446 = vpop.f32.mrb[0].mxu0
    %1447 = vmatprep.mubr.bf16.mxu0 0
    %1448 = vmatmul.mubr.bf16.gmra.mrb[0].mxu0 %v1200
    %v1449 = vpop.f32.mrb[0].mxu0
    %v1450 = vadd.f32 0.0, %v1449
    %v1451 = vpop.f32.mrb[0].mxu0
    %v1452 = vpop.f32.mrb[0].mxu0
    %v1453 = vadd.f32 0.0, %v1452
    %v1454 = vpop.f32.mrb[0].mxu0
    %1455 = vmatprep.mubr.bf16.mxu0 0
    %1456 = vmatmul.mubr.bf16.gmra.mrb[0].mxu0 %v1201
    %v1457 = vpop.f32.mrb[0].mxu0
    %v1458 = vadd.f32 0.0, %v1457
    %v1459 = vpop.f32.mrb[0].mxu0
    %v1460 = vpop.f32.mrb[0].mxu0
    %v1461 = vadd.f32 0.0, %v1460
    %v1462 = vpop.f32.mrb[0].mxu0
    %1463 = vmatprep.mubr.bf16.mxu0 0
    %1464 = vmatmul.mubr.bf16.gmra.mrb[0].mxu0 %v1202
    %v1465 = vpop.f32.mrb[0].mxu0
    %v1466 = vadd.f32 0.0, %v1465
    %v1467 = vpop.f32.mrb[0].mxu0
    %v1468 = vpop.f32.mrb[0].mxu0
    %v1469 = vadd.f32 0.0, %v1468
    %v1470 = vpop.f32.mrb[0].mxu0
    %1471 = vmatprep.mubr.bf16.mxu0 0
    %1472 = vmatmul.mubr.bf16.gmra.mrb[0].mxu0 %v1203
    %v1473 = vpop.f32.mrb[0].mxu0
    %v1474 = vadd.f32 0.0, %v1473
    %v1475 = vpop.f32.mrb[0].mxu0
    %v1476 = vpop.f32.mrb[0].mxu0
    %v1477 = vadd.f32 0.0, %v1476
    %v1478 = vpop.f32.mrb[0].mxu0
    %1479 = vmatprep.mubr.bf16.mxu0 0
    %1480 = vmatmul.mubr.bf16.gmra.mrb[0].mxu0 %v1204
    %v1481 = vpop.f32.mrb[0].mxu0
    %v1482 = vadd.f32 0.0, %v1481
    %v1483 = vpop.f32.mrb[0].mxu0
    %v1484 = vpop.f32.mrb[0].mxu0
    %v1485 = vadd.f32 0.0, %v1484
    %v1486 = vpop.f32.mrb[0].mxu0
    %1487 = vmatprep.mubr.bf16.mxu0 0
    %1488 = vmatmul.mubr.bf16.gmra.mrb[0].mxu0 %v1205
    %v1489 = vpop.f32.mrb[0].mxu0
    %v1490 = vadd.f32 0.0, %v1489
    %v1491 = vpop.f32.mrb[0].mxu0
    %v1492 = vpop.f32.mrb[0].mxu0
    %v1493 = vadd.f32 0.0, %v1492
    %v1494 = vpop.f32.mrb[0].mxu0
    %1495 = vmatprep.mubr.bf16.mxu0 0
    %1496 = vmatmul.mubr.bf16.gmra.mrb[0].mxu0 %v1206
    %v1497 = vpop.f32.mrb[0].mxu0
    %v1498 = vadd.f32 0.0, %v1497
    %v1499 = vpop.f32.mrb[0].mxu0
    %v1500 = vpop.f32.mrb[0].mxu0
    %v1501 = vadd.f32 0.0, %v1500
    %v1502 = vpop.f32.mrb[0].mxu0
    %1503 = vmatprep.mubr.bf16.mxu0 0
    %1504 = vmatmul.mubr.bf16.gmra.mrb[0].mxu0 %v1207
    %v1505 = vpop.f32.mrb[0].mxu0
    %v1506 = vadd.f32 0.0, %v1505
    %v1507 = vpop.f32.mrb[0].mxu0
    %v1508 = vpop.f32.mrb[0].mxu0
    %v1509 = vadd.f32 0.0, %v1508
    %v1510 = vpop.f32.mrb[0].mxu0
    %1511 = vmatprep.mubr.bf16.mxu0 0
    %1512 = vmatmul.mubr.bf16.gmra.mrb[0].mxu0 %v1208
    %v1513 = vpop.f32.mrb[0].mxu0
    %v1514 = vadd.f32 0.0, %v1513
    %v1515 = vpop.f32.mrb[0].mxu0
    %v1516 = vpop.f32.mrb[0].mxu0
    %v1517 = vadd.f32 0.0, %v1516
    %v1518 = vpop.f32.mrb[0].mxu0
    %1519 = vmatprep.mubr.bf16.mxu0 0
    %1520 = vmatmul.mubr.bf16.gmra.mrb[0].mxu0 %v1209
    %v1521 = vpop.f32.mrb[0].mxu0
    %v1522 = vadd.f32 0.0, %v1521
    %v1523 = vpop.f32.mrb[0].mxu0
    %v1524 = vpop.f32.mrb[0].mxu0
    %v1525 = vadd.f32 0.0, %v1524
    %v1526 = vpop.f32.mrb[0].mxu0
    %1527 = vmatprep.mubr.bf16.mxu0 0
    %1528 = vmatmul.mubr.bf16.gmra.mrb[0].mxu0 %v1210
    %v1529 = vpop.f32.mrb[0].mxu0
    %v1530 = vadd.f32 0.0, %v1529
    %v1531 = vpop.f32.mrb[0].mxu0
    %v1532 = vpop.f32.mrb[0].mxu0
    %v1533 = vadd.f32 0.0, %v1532
    %v1534 = vpop.f32.mrb[0].mxu0
    %1535 = vmatprep.mubr.bf16.mxu0 0
    %1536 = vmatmul.mubr.bf16.gmra.mrb[0].mxu0 %v1211
    %v1537 = vpop.f32.mrb[0].mxu0
    %v1538 = vadd.f32 0.0, %v1537
    %v1539 = vpop.f32.mrb[0].mxu0
    %v1540 = vpop.f32.mrb[0].mxu0
    %v1541 = vadd.f32 0.0, %v1540
    %v1542 = vpop.f32.mrb[0].mxu0
    %1543 = vmatprep.mubr.bf16.mxu0 0
    %1544 = vmatmul.mubr.bf16.gmra.mrb[0].mxu0 %v1212
    %v1545 = vpop.f32.mrb[0].mxu0
    %v1546 = vadd.f32 0.0, %v1545
    %v1547 = vpop.f32.mrb[0].mxu0
    %v1548 = vpop.f32.mrb[0].mxu0
    %v1549 = vadd.f32 0.0, %v1548
    %v1550 = vpop.f32.mrb[0].mxu0
    %1551 = vmatprep.mubr.bf16.mxu0 0
    %1552 = vmatmul.mubr.bf16.gmra.mrb[0].mxu0 %v1213
    %v1553 = vpop.f32.mrb[0].mxu0
    %v1554 = vadd.f32 0.0, %v1553
    %v1555 = vpop.f32.mrb[0].mxu0
    %v1556 = vpop.f32.mrb[0].mxu0
    %v1557 = vadd.f32 0.0, %v1556
    %v1558 = vpop.f32.mrb[0].mxu0
    %1559 = vmatprep.mubr.bf16.mxu0 0
    %1560 = vmatmul.mubr.bf16.gmra.mrb[0].mxu0 %v1214
    %v1561 = vpop.f32.mrb[0].mxu0
    %v1562 = vadd.f32 0.0, %v1561
    %v1563 = vpop.f32.mrb[0].mxu0
    %v1564 = vpop.f32.mrb[0].mxu0
    %v1565 = vadd.f32 0.0, %v1564
    %v1566 = vpop.f32.mrb[0].mxu0
    %1567 = vdwg.mxu0
    %v1568 = vpack.c.bf16 %v1317, %v1314
    %v1569 = vpack.c.bf16 %v1325, %v1322
    %v1570 = vpack.c.bf16 %v1333, %v1330
    %v1571 = vpack.c.bf16 %v1341, %v1338
    %v1572 = vpack.c.bf16 %v1349, %v1346
    %v1573 = vpack.c.bf16 %v1357, %v1354
    %v1574 = vpack.c.bf16 %v1365, %v1362
    %v1575 = vpack.c.bf16 %v1373, %v1370
    %v1576 = vpack.c.bf16 %v1381, %v1378
    %v1577 = vpack.c.bf16 %v1389, %v1386
    %v1578 = vpack.c.bf16 %v1397, %v1394
    %v1579 = vpack.c.bf16 %v1405, %v1402
    %v1580 = vpack.c.bf16 %v1413, %v1410
    %v1581 = vpack.c.bf16 %v1421, %v1418
    %v1582 = vpack.c.bf16 %v1429, %v1426
    %v1583 = vpack.c.bf16 %v1437, %v1434
    %v1584 = vpack.c.bf16 %v1445, %v1442
    %v1585 = vpack.c.bf16 %v1453, %v1450
    %v1586 = vpack.c.bf16 %v1461, %v1458
    %v1587 = vpack.c.bf16 %v1469, %v1466
    %v1588 = vpack.c.bf16 %v1477, %v1474
    %v1589 = vpack.c.bf16 %v1485, %v1482
    %v1590 = vpack.c.bf16 %v1493, %v1490
    %v1591 = vpack.c.bf16 %v1501, %v1498
    %v1592 = vpack.c.bf16 %v1509, %v1506
    %v1593 = vpack.c.bf16 %v1517, %v1514
    %v1594 = vpack.c.bf16 %v1525, %v1522
    %v1595 = vpack.c.bf16 %v1533, %v1530
    %v1596 = vpack.c.bf16 %v1541, %v1538
    %v1597 = vpack.c.bf16 %v1549, %v1546
    %v1598 = vpack.c.bf16 %v1557, %v1554
    %v1599 = vpack.c.bf16 %v1565, %v1562
    %v1632 = vunpack.c.l.b16 %v1568
    %v1633 = vunpack.c.h.b16 %v1568
    %v1634 = vunpack.c.l.b16 %v1569
    %v1635 = vunpack.c.h.b16 %v1569
    %v1636 = vunpack.c.l.b16 %v1570
    %v1637 = vunpack.c.h.b16 %v1570
    %v1638 = vunpack.c.l.b16 %v1571
    %v1639 = vunpack.c.h.b16 %v1571
    %v1640 = vunpack.c.l.b16 %v1572
    %v1641 = vunpack.c.h.b16 %v1572
    %v1642 = vunpack.c.l.b16 %v1573
    %v1643 = vunpack.c.h.b16 %v1573
    %v1644 = vunpack.c.l.b16 %v1574
    %v1645 = vunpack.c.h.b16 %v1574
    %v1646 = vunpack.c.l.b16 %v1575
    %v1647 = vunpack.c.h.b16 %v1575
    %v1648 = vunpack.c.l.b16 %v1576
    %v1649 = vunpack.c.h.b16 %v1576
    %v1650 = vunpack.c.l.b16 %v1577
    %v1651 = vunpack.c.h.b16 %v1577
    %v1652 = vunpack.c.l.b16 %v1578
    %v1653 = vunpack.c.h.b16 %v1578
    %v1654 = vunpack.c.l.b16 %v1579
    %v1655 = vunpack.c.h.b16 %v1579
    %v1656 = vunpack.c.l.b16 %v1580
    %v1657 = vunpack.c.h.b16 %v1580
    %v1658 = vunpack.c.l.b16 %v1581
    %v1659 = vunpack.c.h.b16 %v1581
    %v1660 = vunpack.c.l.b16 %v1582
    %v1661 = vunpack.c.h.b16 %v1582
    %v1662 = vunpack.c.l.b16 %v1583
    %v1663 = vunpack.c.h.b16 %v1583
    %v1664 = vunpack.c.l.b16 %v1584
    %v1665 = vunpack.c.h.b16 %v1584
    %v1666 = vunpack.c.l.b16 %v1585
    %v1667 = vunpack.c.h.b16 %v1585
    %v1668 = vunpack.c.l.b16 %v1586
    %v1669 = vunpack.c.h.b16 %v1586
    %v1670 = vunpack.c.l.b16 %v1587
    %v1671 = vunpack.c.h.b16 %v1587
    %v1672 = vunpack.c.l.b16 %v1588
    %v1673 = vunpack.c.h.b16 %v1588
    %v1674 = vunpack.c.l.b16 %v1589
    %v1675 = vunpack.c.h.b16 %v1589
    %v1676 = vunpack.c.l.b16 %v1590
    %v1677 = vunpack.c.h.b16 %v1590
    %v1678 = vunpack.c.l.b16 %v1591
    %v1679 = vunpack.c.h.b16 %v1591
    %v1680 = vunpack.c.l.b16 %v1592
    %v1681 = vunpack.c.h.b16 %v1592
    %v1682 = vunpack.c.l.b16 %v1593
    %v1683 = vunpack.c.h.b16 %v1593
    %v1684 = vunpack.c.l.b16 %v1594
    %v1685 = vunpack.c.h.b16 %v1594
    %v1686 = vunpack.c.l.b16 %v1595
    %v1687 = vunpack.c.h.b16 %v1595
    %v1688 = vunpack.c.l.b16 %v1596
    %v1689 = vunpack.c.h.b16 %v1596
    %v1690 = vunpack.c.l.b16 %v1597
    %v1691 = vunpack.c.h.b16 %v1597
    %v1692 = vunpack.c.l.b16 %v1598
    %v1693 = vunpack.c.h.b16 %v1598
    %v1694 = vunpack.c.l.b16 %v1599
    %v1695 = vunpack.c.h.b16 %v1599
    %v1696 = vpack.c.b16 %v1632, %v1632
    %v1697 = vpack.c.b16 %v1633, %v1633
    %v1698 = vpack.c.b16 %v1634, %v1634
    %v1699 = vpack.c.b16 %v1635, %v1635
    %v1700 = vpack.c.b16 %v1636, %v1636
    %v1701 = vpack.c.b16 %v1637, %v1637
    %v1702 = vpack.c.b16 %v1638, %v1638
    %v1703 = vpack.c.b16 %v1639, %v1639
    %v1704 = vpack.c.b16 %v1640, %v1640
    %v1705 = vpack.c.b16 %v1641, %v1641
    %v1706 = vpack.c.b16 %v1642, %v1642
    %v1707 = vpack.c.b16 %v1643, %v1643
    %v1708 = vpack.c.b16 %v1644, %v1644
    %v1709 = vpack.c.b16 %v1645, %v1645
    %v1710 = vpack.c.b16 %v1646, %v1646
    %v1711 = vpack.c.b16 %v1647, %v1647
    %v1712 = vpack.c.b16 %v1648, %v1648
    %v1713 = vpack.c.b16 %v1649, %v1649
    %v1714 = vpack.c.b16 %v1650, %v1650
    %v1715 = vpack.c.b16 %v1651, %v1651
    %v1716 = vpack.c.b16 %v1652, %v1652
    %v1717 = vpack.c.b16 %v1653, %v1653
    %v1718 = vpack.c.b16 %v1654, %v1654
    %v1719 = vpack.c.b16 %v1655, %v1655
    %v1720 = vpack.c.b16 %v1656, %v1656
    %v1721 = vpack.c.b16 %v1657, %v1657
    %v1722 = vpack.c.b16 %v1658, %v1658
    %v1723 = vpack.c.b16 %v1659, %v1659
    %v1724 = vpack.c.b16 %v1660, %v1660
    %v1725 = vpack.c.b16 %v1661, %v1661
    %v1726 = vpack.c.b16 %v1662, %v1662
    %v1727 = vpack.c.b16 %v1663, %v1663
    %v1728 = vpack.c.b16 %v1664, %v1664
    %v1729 = vpack.c.b16 %v1665, %v1665
    %v1730 = vpack.c.b16 %v1666, %v1666
    %v1731 = vpack.c.b16 %v1667, %v1667
    %v1732 = vpack.c.b16 %v1668, %v1668
    %v1733 = vpack.c.b16 %v1669, %v1669
    %v1734 = vpack.c.b16 %v1670, %v1670
    %v1735 = vpack.c.b16 %v1671, %v1671
    %v1736 = vpack.c.b16 %v1672, %v1672
    %v1737 = vpack.c.b16 %v1673, %v1673
    %v1738 = vpack.c.b16 %v1674, %v1674
    %v1739 = vpack.c.b16 %v1675, %v1675
    %v1740 = vpack.c.b16 %v1676, %v1676
    %v1741 = vpack.c.b16 %v1677, %v1677
    %v1742 = vpack.c.b16 %v1678, %v1678
    %v1743 = vpack.c.b16 %v1679, %v1679
    %v1744 = vpack.c.b16 %v1680, %v1680
    %v1745 = vpack.c.b16 %v1681, %v1681
    %v1746 = vpack.c.b16 %v1682, %v1682
    %v1747 = vpack.c.b16 %v1683, %v1683
    %v1748 = vpack.c.b16 %v1684, %v1684
    %v1749 = vpack.c.b16 %v1685, %v1685
    %v1750 = vpack.c.b16 %v1686, %v1686
    %v1751 = vpack.c.b16 %v1687, %v1687
    %v1752 = vpack.c.b16 %v1688, %v1688
    %v1753 = vpack.c.b16 %v1689, %v1689
    %v1754 = vpack.c.b16 %v1690, %v1690
    %v1755 = vpack.c.b16 %v1691, %v1691
    %v1756 = vpack.c.b16 %v1692, %v1692
    %v1757 = vpack.c.b16 %v1693, %v1693
    %v1758 = vpack.c.b16 %v1694, %v1694
    %v1759 = vpack.c.b16 %v1695, %v1695
    %1824 = vst [vmem:[#allocation3] sm:$0xf] %v1696
    %1825 = vst [vmem:[#allocation3 + $0x4] sm:$0xf] %v1697
    %1826 = vst [vmem:[#allocation3 + $0x8] sm:$0xf] %v1698
    %1827 = vst [vmem:[#allocation3 + $0xc] sm:$0xf] %v1699
    %1828 = vst [vmem:[#allocation3 + $0x10] sm:$0xf] %v1700
    %1829 = vst [vmem:[#allocation3 + $0x14] sm:$0xf] %v1701
    %1830 = vst [vmem:[#allocation3 + $0x18] sm:$0xf] %v1702
    %1831 = vst [vmem:[#allocation3 + $0x1c] sm:$0xf] %v1703
    %1832 = vst [vmem:[#allocation3 + $0x20] sm:$0xf] %v1704
    %1833 = vst [vmem:[#allocation3 + $0x24] sm:$0xf] %v1705
    %1834 = vst [vmem:[#allocation3 + $0x28] sm:$0xf] %v1706
    %1835 = vst [vmem:[#allocation3 + $0x2c] sm:$0xf] %v1707
    %1836 = vst [vmem:[#allocation3 + $0x30] sm:$0xf] %v1708
    %1837 = vst [vmem:[#allocation3 + $0x34] sm:$0xf] %v1709
    %1838 = vst [vmem:[#allocation3 + $0x38] sm:$0xf] %v1710
    %1839 = vst [vmem:[#allocation3 + $0x3c] sm:$0xf] %v1711
    %1840 = vst [vmem:[#allocation3 + $0x40] sm:$0xf] %v1712
    %1841 = vst [vmem:[#allocation3 + $0x44] sm:$0xf] %v1713
    %1842 = vst [vmem:[#allocation3 + $0x48] sm:$0xf] %v1714
    %1843 = vst [vmem:[#allocation3 + $0x4c] sm:$0xf] %v1715
    %1844 = vst [vmem:[#allocation3 + $0x50] sm:$0xf] %v1716
    %1845 = vst [vmem:[#allocation3 + $0x54] sm:$0xf] %v1717
    %1846 = vst [vmem:[#allocation3 + $0x58] sm:$0xf] %v1718
    %1847 = vst [vmem:[#allocation3 + $0x5c] sm:$0xf] %v1719
    %1848 = vst [vmem:[#allocation3 + $0x60] sm:$0xf] %v1720
    %1849 = vst [vmem:[#allocation3 + $0x64] sm:$0xf] %v1721
    %1850 = vst [vmem:[#allocation3 + $0x68] sm:$0xf] %v1722
    %1851 = vst [vmem:[#allocation3 + $0x6c] sm:$0xf] %v1723
    %1852 = vst [vmem:[#allocation3 + $0x70] sm:$0xf] %v1724
    %1853 = vst [vmem:[#allocation3 + $0x74] sm:$0xf] %v1725
    %1854 = vst [vmem:[#allocation3 + $0x78] sm:$0xf] %v1726
    %1855 = vst [vmem:[#allocation3 + $0x7c] sm:$0xf] %v1727
    %1856 = vst [vmem:[#allocation3 + $0x80] sm:$0xf] %v1728
    %1857 = vst [vmem:[#allocation3 + $0x84] sm:$0xf] %v1729
    %1858 = vst [vmem:[#allocation3 + $0x88] sm:$0xf] %v1730
    %1859 = vst [vmem:[#allocation3 + $0x8c] sm:$0xf] %v1731
    %1860 = vst [vmem:[#allocation3 + $0x90] sm:$0xf] %v1732
    %1861 = vst [vmem:[#allocation3 + $0x94] sm:$0xf] %v1733
    %1862 = vst [vmem:[#allocation3 + $0x98] sm:$0xf] %v1734
    %1863 = vst [vmem:[#allocation3 + $0x9c] sm:$0xf] %v1735
    %1864 = vst [vmem:[#allocation3 + $0xa0] sm:$0xf] %v1736
    %1865 = vst [vmem:[#allocation3 + $0xa4] sm:$0xf] %v1737
    %1866 = vst [vmem:[#allocation3 + $0xa8] sm:$0xf] %v1738
    %1867 = vst [vmem:[#allocation3 + $0xac] sm:$0xf] %v1739
    %1868 = vst [vmem:[#allocation3 + $0xb0] sm:$0xf] %v1740
    %1869 = vst [vmem:[#allocation3 + $0xb4] sm:$0xf] %v1741
    %1870 = vst [vmem:[#allocation3 + $0xb8] sm:$0xf] %v1742
    %1871 = vst [vmem:[#allocation3 + $0xbc] sm:$0xf] %v1743
    %1872 = vst [vmem:[#allocation3 + $0xc0] sm:$0xf] %v1744
    %1873 = vst [vmem:[#allocation3 + $0xc4] sm:$0xf] %v1745
    %1874 = vst [vmem:[#allocation3 + $0xc8] sm:$0xf] %v1746
    %1875 = vst [vmem:[#allocation3 + $0xcc] sm:$0xf] %v1747
    %1876 = vst [vmem:[#allocation3 + $0xd0] sm:$0xf] %v1748
    %1877 = vst [vmem:[#allocation3 + $0xd4] sm:$0xf] %v1749
    %1878 = vst [vmem:[#allocation3 + $0xd8] sm:$0xf] %v1750
    %1879 = vst [vmem:[#allocation3 + $0xdc] sm:$0xf] %v1751
    %1880 = vst [vmem:[#allocation3 + $0xe0] sm:$0xf] %v1752
    %1881 = vst [vmem:[#allocation3 + $0xe4] sm:$0xf] %v1753
    %1882 = vst [vmem:[#allocation3 + $0xe8] sm:$0xf] %v1754
    %1883 = vst [vmem:[#allocation3 + $0xec] sm:$0xf] %v1755
    %1884 = vst [vmem:[#allocation3 + $0xf0] sm:$0xf] %v1756
    %1885 = vst [vmem:[#allocation3 + $0xf4] sm:$0xf] %v1757
    %1886 = vst [vmem:[#allocation3 + $0xf8] sm:$0xf] %v1758
    %1887 = vst [vmem:[#allocation3 + $0xfc] sm:$0xf] %v1759
    // Predicated region
    $region26: #{tpu_custom_call.1} parent=1 // pred_check
      _
    $region27: #{tpu_custom_call.1} parent=1 // pred_check_branch
      %1889 = sbr.rel (0) target = $region29
    $region28: #{tpu_custom_call.1} parent=1 // pred_region
      %s1891 = ssub.s32 4096, 4096
      %1892 = vsyncadd [#allocation4], %s1891
      %s1893 = sshll.u32 [#allocation3], 4
      %s1894 = int_to_ptr.vmem [resolvable:$true] %s1893
      %1899 = dma.vmem_to_hbm [thread:$0]  %s1894, 4096, %s6, [#allocation4], 64, 64, 4
    $region29: #{tpu_custom_call.1} parent=1 // pred_fallthru
      _
    // Predicated region
    $region30: #{tpu_custom_call.1} parent=1 // pred_check
      _
    $region31: #{tpu_custom_call.1} parent=1 // pred_check_branch
      %1901 = sbr.rel (0) target = $region33
    $region32: #{tpu_custom_call.1} parent=1 // pred_region
      %1902 = dma.done [#allocation4], 4096
    $region33: #{tpu_custom_call.1} parent=1 // pred_fallthru
      _
    %1903 = vsyncpa [#allocation4], 1

</llo_original>
